<compile_context>
chip_gen: v5e
topology: v5e:2x2
jax: 0.10.0
libtpu: 0.0.40
codegen_flags: <defaults>
</compile_context>

<pallas_src>
import math

import jax
import jax.numpy as jnp
from jax.experimental import pallas as pl
from jax.experimental.pallas import tpu as pltpu


# ----------------------------- Pallas kernel -------------------------------- #
def carpet_kernel(x_ref, wc_ref, bc_ref, w1_ref, b1_ref, w2_ref, b2_ref,
                  w4_ref, b4_ref, out_ref):
    # x_ref  : (TB, S, E)       TB batch elements per grid step
    # wc_ref : (SC*E, K)        im2col conv weight, row index = dh*E + e
    # bc_ref : (1, K)
    # w1_ref : (P*K, H0)        fc1 weight, row index = p*K + k
    # b1_ref : (1, H0)
    # w2_ref : (H0, H1)  b2_ref: (1, H1)
    # w4_ref : (H1, Cp)  b4_ref: (1, Cp)   (padded classes carry a -1e30 bias)
    # out_ref: (TB, Cp)
    TB, S, E = x_ref.shape
    K = wc_ref.shape[1]
    SC = wc_ref.shape[0] // E
    H0 = w1_ref.shape[1]
    P = w1_ref.shape[0] // K
    H_out = S - SC + 1
    ps = H_out // P
    wdt = w1_ref.dtype

    x = x_ref[...]
    wc = wc_ref[...]
    bc = bc_ref[...]

    # Per-element conv + piecewise max-pool.  TB is small (compile-time), so an
    # unrolled Python loop is fine; the fc layers below are fully batched.
    # TODO(synk): for TB >~ 64 switch this to a fori_loop writing a (TB, P*K)
    # VMEM scratch to bound live ranges.
    feats_rows = []
    for b in range(TB):
        xe = x[b]                                              # (S, E)
        # im2col: one fused MXU matmul instead of SC shifted dots.
        cols = jnp.concatenate(
            [xe[dh:dh + H_out, :] for dh in range(SC)], axis=-1)   # (H_out, SC*E)
        conv = jnp.dot(cols, wc, preferred_element_type=jnp.float32)
        conv = jnp.maximum(conv + bc, 0.0)                     # (H_out, K), ReLU

        # Piecewise adaptive max-pool over H_out; the final piece intentionally
        # overlaps the previous one (original module's for/else quirk).
        pieces = [jnp.max(conv[p * ps:(p + 1) * ps, :], axis=0, keepdims=True)
                  for p in range(P - 1)]
        pieces.append(jnp.max(conv[(P - 2) * ps:, :], axis=0, keepdims=True))
        feats_rows.append(jnp.concatenate(pieces, axis=-1))    # (1, P*K), (p,k)

    feats = jnp.concatenate(feats_rows, axis=0)                # (TB, P*K)

    # Batched fully-connected stack (one MXU matmul each).
    h1 = jax.nn.sigmoid(
        jnp.dot(feats.astype(wdt), w1_ref[...],
                preferred_element_type=jnp.float32) + b1_ref[...])
    h2 = jax.nn.sigmoid(
        jnp.dot(h1.astype(wdt), w2_ref[...],
                preferred_element_type=jnp.float32) + b2_ref[...])
    logits = jnp.dot(h2.astype(wdt), w4_ref[...],
                     preferred_element_type=jnp.float32) + b4_ref[...]

    # softmax(dim=1); padded classes have -1e30 logits -> exactly 0 probability.
    z = logits - jnp.max(logits, axis=-1, keepdims=True)
    ez = jnp.exp(z)
    # (exact divide; pl.reciprocal(..., approx=True) is an option at scale)
    out_ref[...] = ez / jnp.sum(ez, axis=-1, keepdims=True)


# ------------------------------- wrapper ------------------------------------ #
def _round_up(n, m):
    return ((n + m - 1) // m) * m


def convo_carpet_deep2_forward(x4, wc_t, bc_t, w1_t, b1_t, w2_t, b2_t,
                               w4_t, b4_t, pieces_count, *,
                               block_batch=None, use_bf16=False):
    """ConvoCarpetDeep2 forward (eval mode, CLASSIFICATION).

    x4   : (B, 1, S, E) float32 -- PyTorch NCHW input with in_channels=1.
    wc_t : (K, 1, SC, E) conv weight, bc_t: (K,) conv bias.
    w*_t : Linear weights in PyTorch (out_features, in_features) layout.
    Returns softmax probabilities (B, C).
    """
    B, _, S, E = x4.shape
    K, _, SC, _ = wc_t.shape
    H0 = w1_t.shape[0]
    H1 = w2_t.shape[0]
    C = w4_t.shape[0]
    P = pieces_count
    H_out = S - SC + 1
    assert P >= 2 and H_out >= P, "need pieces_count >= 2 and H_out >= pieces_count"
    assert w1_t.shape[1] == K * P

    # ---------------- parameter re-layout for the kernel ----------------
    x = x4[:, 0]                                                    # (B, S, E)
    # conv weight -> im2col layout: row index = dh*E + e
    wc = jnp.transpose(wc_t[:, 0], (1, 2, 0)).reshape(SC * E, K)
    bc = bc_t.reshape(1, K).astype(jnp.float32)
    # torch flatten order is feature = k*P + p; kernel builds feats in (p,k) order
    w1 = jnp.transpose(w1_t.reshape(H0, K, P), (2, 1, 0)).reshape(P * K, H0)
    b1 = b1_t.reshape(1, H0).astype(jnp.float32)
    w2 = w2_t.T
    b2 = b2_t.reshape(1, H1).astype(jnp.float32)
    # Pad the class dim to a full 128-lane width for dense output stores.
    # Padded classes get a -1e30 bias -> softmax weight exactly 0.
    C_pad = _round_up(C, 128)
    w4 = jnp.zeros((H1, C_pad), jnp.float32).at[:, :C].set(w4_t.T)
    b4 = jnp.full((1, C_pad), -1e30, jnp.float32).at[:, :C].set(b4_t)

    if use_bf16:
        # bf16 MXU inputs (full rate on v6e/v7x), f32 accumulation.
        # TODO(synk): loosen downstream tolerances to ~1e-3 when enabling this.
        cast = jnp.bfloat16
    else:
        cast = jnp.float32
    x = x.astype(cast)
    wc = wc.astype(cast)
    w1 = w1.astype(cast)
    w2 = w2.astype(cast)
    w4 = w4.astype(cast)

    # ---------------- batch tiling ----------------
    # TB batch elements per grid step; keep TB a multiple of 8 so the output
    # block stays (8,128)-aligned.  For real (large) shapes size TB against
    # VMEM (64 MiB physical on v7x) and keep >=2 grid steps for the 2 TCs.
    if block_batch is None:
        block_batch = min(64, _round_up(B, 8))
    TB = max(8, _round_up(block_batch, 8))
    B_pad = _round_up(B, TB)
    if B_pad != B:
        x = jnp.pad(x, ((0, B_pad - B), (0, 0), (0, 0)))

    out = pl.pallas_call(
        carpet_kernel,
        out_shape=jax.ShapeDtypeStruct((B_pad, C_pad), jnp.float32),
        grid=(B_pad // TB,),
        in_specs=[
            pl.BlockSpec((TB, S, E), lambda b: (b, 0, 0)),     # x tile
            pl.BlockSpec((SC * E, K), lambda b: (0, 0)),       # conv weight (im2col)
            pl.BlockSpec((1, K), lambda b: (0, 0)),            # conv bias
            pl.BlockSpec((P * K, H0), lambda b: (0, 0)),       # fc1 weight
            pl.BlockSpec((1, H0), lambda b: (0, 0)),           # fc1 bias
            pl.BlockSpec((H0, H1), lambda b: (0, 0)),          # fc2 weight
            pl.BlockSpec((1, H1), lambda b: (0, 0)),           # fc2 bias
            pl.BlockSpec((H1, C_pad), lambda b: (0, 0)),       # fc4 weight (padded)
            pl.BlockSpec((1, C_pad), lambda b: (0, 0)),        # fc4 bias (padded)
        ],
        out_specs=pl.BlockSpec((TB, C_pad), lambda b: (b, 0)),
        compiler_params=pltpu.CompilerParams(
            dimension_semantics=("parallel",)),
    )(x, wc, bc, w1, b1, w2, b2, w4, b4)
    return out[:B, :C]


# ------------------------ pure-JAX reference (check) ------------------------ #
def ref_forward(x4, wc_t, bc_t, w1_t, b1_t, w2_t, b2_t, w4_t, b4_t, P):
    # Mirrors the PyTorch forward (NCHW conv, for/else pooling quirk, eval mode).
    with jax.default_matmul_precision("highest"):
        B = x4.shape[0]
        K, _, SC, E = wc_t.shape
        S = x4.shape[2]
        H_out = S - SC + 1
        cols = jnp.stack([x4[:, 0, dh:dh + H_out, :] for dh in range(SC)], axis=2)
        conv = jnp.einsum('bhse,kse->bkh', cols, wc_t[:, 0]) + bc_t[None, :, None]
        conv = jnp.maximum(conv, 0.0)
        ps = H_out // P
        pieces = [jnp.max(conv[:, :, p * ps:(p + 1) * ps], axis=2)
                  for p in range(P - 1)]
        pieces.append(jnp.max(conv[:, :, (P - 2) * ps:], axis=2))
        pooled = jnp.stack(pieces, axis=2)                # (B, K, P)
        feats = pooled.reshape(B, K * P)                  # flatten(start_dim=1)
        h1 = jax.nn.sigmoid(feats @ w1_t.T + b1_t)
        h2 = jax.nn.sigmoid(h1 @ w2_t.T + b2_t)
        logits = h2 @ w4_t.T + b4_t
        return jax.nn.softmax(logits, axis=1)


# --------------------------------- main -------------------------------------- #
if __name__ == "__main__":
    # Small, consistent hyper-params (module defaults scaled down):
    B, S = 12, 16                # batch, number of sentences (conv "height")
    E = 32                       # embedding_size
    K = 16                       # kernels_count
    SC = 2                       # sentences_count (conv kernel height)
    H0, H1 = 10, 10              # hidden_layers
    P = 5                        # pieces_count
    C = 4                        # number_of_classes

    key = jax.random.PRNGKey(0)
    ks = jax.random.split(key, 10)

    def unif(k, shape, fan_in):
        b = 1.0 / math.sqrt(fan_in)
        return jax.random.uniform(k, shape, jnp.float32, -b, b)

    # Deterministic synthetic parameters, PyTorch layouts:
    wc_t = unif(ks[0], (K, 1, SC, E), SC * E)        # Conv2d weight
    bc_t = unif(ks[1], (K,), SC * E)                 # Conv2d bias
    w1_t = unif(ks[2], (H0, K * P), K * P)           # fc1 (Linear) weight
    b1_t = unif(ks[3], (H0,), K * P)
    w2_t = unif(ks[4], (H1, H0), H0)                 # fc2 weight
    b2_t = unif(ks[5], (H1,), H0)
    w4_t = unif(ks[6], (C, H1), H1)                  # fc4 weight
    b4_t = unif(ks[7], (C,), H1)

    # Input in PyTorch layout (B, 1, S, E).
    x4 = jax.random.normal(ks[8], (B, 1, S, E), jnp.float32)

    # block_batch=8 -> B padded to 16 -> 2 parallel grid steps (TB=8 each).
    out = convo_carpet_deep2_forward(x4, wc_t, bc_t, w1_t, b1_t, w2_t, b2_t,
                                     w4_t, b4_t, P, block_batch=8)
    out = jax.block_until_ready(out)

    ref = ref_forward(x4, wc_t, bc_t, w1_t, b1_t, w2_t, b2_t, w4_t, b4_t, P)
    assert out.shape == (B, C)
    assert jnp.allclose(out, ref, atol=1e-5, rtol=1e-5), "mismatch vs reference"
    assert jnp.allclose(jnp.sum(out, axis=1), 1.0, atol=1e-5)

    print("KERNEL_OK")
</pallas_src>

<mosaic_0001>
module attributes {stable_mosaic.version = 11 : i64} {
  func.func @carpet_kernel(%arg0: i32, %arg1: memref<8x16x32xf32, #tpu.memory_space<vmem>>, %arg2: memref<64x16xf32, #tpu.memory_space<vmem>>, %arg3: memref<1x16xf32, #tpu.memory_space<vmem>>, %arg4: memref<80x10xf32, #tpu.memory_space<vmem>>, %arg5: memref<1x10xf32, #tpu.memory_space<vmem>>, %arg6: memref<10x10xf32, #tpu.memory_space<vmem>>, %arg7: memref<1x10xf32, #tpu.memory_space<vmem>>, %arg8: memref<10x128xf32, #tpu.memory_space<vmem>>, %arg9: memref<1x128xf32, #tpu.memory_space<vmem>>, %arg10: memref<8x128xf32, #tpu.memory_space<vmem>>) attributes {dimension_semantics = [#tpu.dimension_semantics<parallel>], iteration_bounds = array<i64: 2>, scalar_prefetch = 0 : i64, scratch_operands = 0 : i64, tpu.core_type = #tpu.core_type<tc>, window_params = [{transform_indices = @transform_0, window_bounds = array<i64: 8, 16, 32>}, {pipeline_mode = #tpu.pipeline_mode<synchronous>, transform_indices = @transform_1, window_bounds = array<i64: 64, 16>}, {pipeline_mode = #tpu.pipeline_mode<synchronous>, transform_indices = @transform_2, window_bounds = array<i64: 1, 16>}, {pipeline_mode = #tpu.pipeline_mode<synchronous>, transform_indices = @transform_3, window_bounds = array<i64: 80, 10>}, {pipeline_mode = #tpu.pipeline_mode<synchronous>, transform_indices = @transform_4, window_bounds = array<i64: 1, 10>}, {pipeline_mode = #tpu.pipeline_mode<synchronous>, transform_indices = @transform_5, window_bounds = array<i64: 10, 10>}, {pipeline_mode = #tpu.pipeline_mode<synchronous>, transform_indices = @transform_6, window_bounds = array<i64: 1, 10>}, {pipeline_mode = #tpu.pipeline_mode<synchronous>, transform_indices = @transform_7, window_bounds = array<i64: 10, 128>}, {pipeline_mode = #tpu.pipeline_mode<synchronous>, transform_indices = @transform_8, window_bounds = array<i64: 1, 128>}, {transform_indices = @transform_9, window_bounds = array<i64: 8, 128>}]} {
    %c0 = arith.constant 0 : index
    %c0_0 = arith.constant 0 : index
    %c0_1 = arith.constant 0 : index
    %0 = vector.load %arg1[%c0, %c0_0, %c0_1] : memref<8x16x32xf32, #tpu.memory_space<vmem>>, vector<8x16x32xf32>
    %c0_2 = arith.constant 0 : index
    %c0_3 = arith.constant 0 : index
    %1 = vector.load %arg2[%c0_2, %c0_3] : memref<64x16xf32, #tpu.memory_space<vmem>>, vector<64x16xf32>
    %c0_4 = arith.constant 0 : index
    %c0_5 = arith.constant 0 : index
    %2 = vector.load %arg3[%c0_4, %c0_5] : memref<1x16xf32, #tpu.memory_space<vmem>>, vector<1x16xf32>
    %3 = vector.extract_strided_slice %0 {offsets = [0, 0, 0], sizes = [1, 16, 32], strides = [1, 1, 1]} : vector<8x16x32xf32> to vector<1x16x32xf32>
    %4 = vector.shape_cast %3 : vector<1x16x32xf32> to vector<16x32xf32>
    %5 = vector.extract_strided_slice %4 {offsets = [0, 0], sizes = [15, 32], strides = [1, 1]} : vector<16x32xf32> to vector<15x32xf32>
    %6 = vector.extract_strided_slice %4 {offsets = [1, 0], sizes = [15, 32], strides = [1, 1]} : vector<16x32xf32> to vector<15x32xf32>
    %7 = tpu.concatenate %5, %6 in 1 : vector<15x32xf32>, vector<15x32xf32> -> vector<15x64xf32>
    %cst = arith.constant dense<0.000000e+00> : vector<15x16xf32>
    %8 = tpu.matmul %7, %1, %cst {dimension_numbers = #tpu.dot_dimension_numbers<[1], [0], [0], [1], [0, 0, 1, 1], [], []>} : vector<15x64xf32>, vector<64x16xf32>, vector<15x16xf32> -> vector<15x16xf32>
    %9 = vector.broadcast %2 : vector<1x16xf32> to vector<15x16xf32>
    %10 = arith.addf %8, %9 : vector<15x16xf32>
    %cst_6 = arith.constant 0.000000e+00 : f32
    %11 = vector.broadcast %cst_6 : f32 to vector<15x16xf32>
    %12 = arith.maximumf %10, %11 : vector<15x16xf32>
    %13 = vector.extract_strided_slice %12 {offsets = [0, 0], sizes = [3, 16], strides = [1, 1]} : vector<15x16xf32> to vector<3x16xf32>
    %cst_7 = arith.constant dense<0xFF800000> : vector<16xf32>
    %14 = vector.multi_reduction <maximumf>, %13, %cst_7 [0] : vector<3x16xf32> to vector<16xf32>
    %15 = vector.shape_cast %14 : vector<16xf32> to vector<1x16xf32>
    %16 = vector.extract_strided_slice %12 {offsets = [3, 0], sizes = [3, 16], strides = [1, 1]} : vector<15x16xf32> to vector<3x16xf32>
    %cst_8 = arith.constant dense<0xFF800000> : vector<16xf32>
    %17 = vector.multi_reduction <maximumf>, %16, %cst_8 [0] : vector<3x16xf32> to vector<16xf32>
    %18 = vector.shape_cast %17 : vector<16xf32> to vector<1x16xf32>
    %19 = vector.extract_strided_slice %12 {offsets = [6, 0], sizes = [3, 16], strides = [1, 1]} : vector<15x16xf32> to vector<3x16xf32>
    %cst_9 = arith.constant dense<0xFF800000> : vector<16xf32>
    %20 = vector.multi_reduction <maximumf>, %19, %cst_9 [0] : vector<3x16xf32> to vector<16xf32>
    %21 = vector.shape_cast %20 : vector<16xf32> to vector<1x16xf32>
    %22 = vector.extract_strided_slice %12 {offsets = [9, 0], sizes = [3, 16], strides = [1, 1]} : vector<15x16xf32> to vector<3x16xf32>
    %cst_10 = arith.constant dense<0xFF800000> : vector<16xf32>
    %23 = vector.multi_reduction <maximumf>, %22, %cst_10 [0] : vector<3x16xf32> to vector<16xf32>
    %24 = vector.shape_cast %23 : vector<16xf32> to vector<1x16xf32>
    %25 = vector.extract_strided_slice %12 {offsets = [9, 0], sizes = [6, 16], strides = [1, 1]} : vector<15x16xf32> to vector<6x16xf32>
    %cst_11 = arith.constant dense<0xFF800000> : vector<16xf32>
    %26 = vector.multi_reduction <maximumf>, %25, %cst_11 [0] : vector<6x16xf32> to vector<16xf32>
    %27 = vector.shape_cast %26 : vector<16xf32> to vector<1x16xf32>
    %28 = tpu.concatenate %15, %18, %21, %24, %27 in 1 : vector<1x16xf32>, vector<1x16xf32>, vector<1x16xf32>, vector<1x16xf32>, vector<1x16xf32> -> vector<1x80xf32>
    %29 = vector.extract_strided_slice %0 {offsets = [1, 0, 0], sizes = [1, 16, 32], strides = [1, 1, 1]} : vector<8x16x32xf32> to vector<1x16x32xf32>
    %30 = vector.shape_cast %29 : vector<1x16x32xf32> to vector<16x32xf32>
    %31 = vector.extract_strided_slice %30 {offsets = [0, 0], sizes = [15, 32], strides = [1, 1]} : vector<16x32xf32> to vector<15x32xf32>
    %32 = vector.extract_strided_slice %30 {offsets = [1, 0], sizes = [15, 32], strides = [1, 1]} : vector<16x32xf32> to vector<15x32xf32>
    %33 = tpu.concatenate %31, %32 in 1 : vector<15x32xf32>, vector<15x32xf32> -> vector<15x64xf32>
    %cst_12 = arith.constant dense<0.000000e+00> : vector<15x16xf32>
    %34 = tpu.matmul %33, %1, %cst_12 {dimension_numbers = #tpu.dot_dimension_numbers<[1], [0], [0], [1], [0, 0, 1, 1], [], []>} : vector<15x64xf32>, vector<64x16xf32>, vector<15x16xf32> -> vector<15x16xf32>
    %35 = vector.broadcast %2 : vector<1x16xf32> to vector<15x16xf32>
    %36 = arith.addf %34, %35 : vector<15x16xf32>
    %cst_13 = arith.constant 0.000000e+00 : f32
    %37 = vector.broadcast %cst_13 : f32 to vector<15x16xf32>
    %38 = arith.maximumf %36, %37 : vector<15x16xf32>
    %39 = vector.extract_strided_slice %38 {offsets = [0, 0], sizes = [3, 16], strides = [1, 1]} : vector<15x16xf32> to vector<3x16xf32>
    %cst_14 = arith.constant dense<0xFF800000> : vector<16xf32>
    %40 = vector.multi_reduction <maximumf>, %39, %cst_14 [0] : vector<3x16xf32> to vector<16xf32>
    %41 = vector.shape_cast %40 : vector<16xf32> to vector<1x16xf32>
    %42 = vector.extract_strided_slice %38 {offsets = [3, 0], sizes = [3, 16], strides = [1, 1]} : vector<15x16xf32> to vector<3x16xf32>
    %cst_15 = arith.constant dense<0xFF800000> : vector<16xf32>
    %43 = vector.multi_reduction <maximumf>, %42, %cst_15 [0] : vector<3x16xf32> to vector<16xf32>
    %44 = vector.shape_cast %43 : vector<16xf32> to vector<1x16xf32>
    %45 = vector.extract_strided_slice %38 {offsets = [6, 0], sizes = [3, 16], strides = [1, 1]} : vector<15x16xf32> to vector<3x16xf32>
    %cst_16 = arith.constant dense<0xFF800000> : vector<16xf32>
    %46 = vector.multi_reduction <maximumf>, %45, %cst_16 [0] : vector<3x16xf32> to vector<16xf32>
    %47 = vector.shape_cast %46 : vector<16xf32> to vector<1x16xf32>
    %48 = vector.extract_strided_slice %38 {offsets = [9, 0], sizes = [3, 16], strides = [1, 1]} : vector<15x16xf32> to vector<3x16xf32>
    %cst_17 = arith.constant dense<0xFF800000> : vector<16xf32>
    %49 = vector.multi_reduction <maximumf>, %48, %cst_17 [0] : vector<3x16xf32> to vector<16xf32>
    %50 = vector.shape_cast %49 : vector<16xf32> to vector<1x16xf32>
    %51 = vector.extract_strided_slice %38 {offsets = [9, 0], sizes = [6, 16], strides = [1, 1]} : vector<15x16xf32> to vector<6x16xf32>
    %cst_18 = arith.constant dense<0xFF800000> : vector<16xf32>
    %52 = vector.multi_reduction <maximumf>, %51, %cst_18 [0] : vector<6x16xf32> to vector<16xf32>
    %53 = vector.shape_cast %52 : vector<16xf32> to vector<1x16xf32>
    %54 = tpu.concatenate %41, %44, %47, %50, %53 in 1 : vector<1x16xf32>, vector<1x16xf32>, vector<1x16xf32>, vector<1x16xf32>, vector<1x16xf32> -> vector<1x80xf32>
    %55 = vector.extract_strided_slice %0 {offsets = [2, 0, 0], sizes = [1, 16, 32], strides = [1, 1, 1]} : vector<8x16x32xf32> to vector<1x16x32xf32>
    %56 = vector.shape_cast %55 : vector<1x16x32xf32> to vector<16x32xf32>
    %57 = vector.extract_strided_slice %56 {offsets = [0, 0], sizes = [15, 32], strides = [1, 1]} : vector<16x32xf32> to vector<15x32xf32>
    %58 = vector.extract_strided_slice %56 {offsets = [1, 0], sizes = [15, 32], strides = [1, 1]} : vector<16x32xf32> to vector<15x32xf32>
    %59 = tpu.concatenate %57, %58 in 1 : vector<15x32xf32>, vector<15x32xf32> -> vector<15x64xf32>
    %cst_19 = arith.constant dense<0.000000e+00> : vector<15x16xf32>
    %60 = tpu.matmul %59, %1, %cst_19 {dimension_numbers = #tpu.dot_dimension_numbers<[1], [0], [0], [1], [0, 0, 1, 1], [], []>} : vector<15x64xf32>, vector<64x16xf32>, vector<15x16xf32> -> vector<15x16xf32>
    %61 = vector.broadcast %2 : vector<1x16xf32> to vector<15x16xf32>
    %62 = arith.addf %60, %61 : vector<15x16xf32>
    %cst_20 = arith.constant 0.000000e+00 : f32
    %63 = vector.broadcast %cst_20 : f32 to vector<15x16xf32>
    %64 = arith.maximumf %62, %63 : vector<15x16xf32>
    %65 = vector.extract_strided_slice %64 {offsets = [0, 0], sizes = [3, 16], strides = [1, 1]} : vector<15x16xf32> to vector<3x16xf32>
    %cst_21 = arith.constant dense<0xFF800000> : vector<16xf32>
    %66 = vector.multi_reduction <maximumf>, %65, %cst_21 [0] : vector<3x16xf32> to vector<16xf32>
    %67 = vector.shape_cast %66 : vector<16xf32> to vector<1x16xf32>
    %68 = vector.extract_strided_slice %64 {offsets = [3, 0], sizes = [3, 16], strides = [1, 1]} : vector<15x16xf32> to vector<3x16xf32>
    %cst_22 = arith.constant dense<0xFF800000> : vector<16xf32>
    %69 = vector.multi_reduction <maximumf>, %68, %cst_22 [0] : vector<3x16xf32> to vector<16xf32>
    %70 = vector.shape_cast %69 : vector<16xf32> to vector<1x16xf32>
    %71 = vector.extract_strided_slice %64 {offsets = [6, 0], sizes = [3, 16], strides = [1, 1]} : vector<15x16xf32> to vector<3x16xf32>
    %cst_23 = arith.constant dense<0xFF800000> : vector<16xf32>
    %72 = vector.multi_reduction <maximumf>, %71, %cst_23 [0] : vector<3x16xf32> to vector<16xf32>
    %73 = vector.shape_cast %72 : vector<16xf32> to vector<1x16xf32>
    %74 = vector.extract_strided_slice %64 {offsets = [9, 0], sizes = [3, 16], strides = [1, 1]} : vector<15x16xf32> to vector<3x16xf32>
    %cst_24 = arith.constant dense<0xFF800000> : vector<16xf32>
    %75 = vector.multi_reduction <maximumf>, %74, %cst_24 [0] : vector<3x16xf32> to vector<16xf32>
    %76 = vector.shape_cast %75 : vector<16xf32> to vector<1x16xf32>
    %77 = vector.extract_strided_slice %64 {offsets = [9, 0], sizes = [6, 16], strides = [1, 1]} : vector<15x16xf32> to vector<6x16xf32>
    %cst_25 = arith.constant dense<0xFF800000> : vector<16xf32>
    %78 = vector.multi_reduction <maximumf>, %77, %cst_25 [0] : vector<6x16xf32> to vector<16xf32>
    %79 = vector.shape_cast %78 : vector<16xf32> to vector<1x16xf32>
    %80 = tpu.concatenate %67, %70, %73, %76, %79 in 1 : vector<1x16xf32>, vector<1x16xf32>, vector<1x16xf32>, vector<1x16xf32>, vector<1x16xf32> -> vector<1x80xf32>
    %81 = vector.extract_strided_slice %0 {offsets = [3, 0, 0], sizes = [1, 16, 32], strides = [1, 1, 1]} : vector<8x16x32xf32> to vector<1x16x32xf32>
    %82 = vector.shape_cast %81 : vector<1x16x32xf32> to vector<16x32xf32>
    %83 = vector.extract_strided_slice %82 {offsets = [0, 0], sizes = [15, 32], strides = [1, 1]} : vector<16x32xf32> to vector<15x32xf32>
    %84 = vector.extract_strided_slice %82 {offsets = [1, 0], sizes = [15, 32], strides = [1, 1]} : vector<16x32xf32> to vector<15x32xf32>
    %85 = tpu.concatenate %83, %84 in 1 : vector<15x32xf32>, vector<15x32xf32> -> vector<15x64xf32>
    %cst_26 = arith.constant dense<0.000000e+00> : vector<15x16xf32>
    %86 = tpu.matmul %85, %1, %cst_26 {dimension_numbers = #tpu.dot_dimension_numbers<[1], [0], [0], [1], [0, 0, 1, 1], [], []>} : vector<15x64xf32>, vector<64x16xf32>, vector<15x16xf32> -> vector<15x16xf32>
    %87 = vector.broadcast %2 : vector<1x16xf32> to vector<15x16xf32>
    %88 = arith.addf %86, %87 : vector<15x16xf32>
    %cst_27 = arith.constant 0.000000e+00 : f32
    %89 = vector.broadcast %cst_27 : f32 to vector<15x16xf32>
    %90 = arith.maximumf %88, %89 : vector<15x16xf32>
    %91 = vector.extract_strided_slice %90 {offsets = [0, 0], sizes = [3, 16], strides = [1, 1]} : vector<15x16xf32> to vector<3x16xf32>
    %cst_28 = arith.constant dense<0xFF800000> : vector<16xf32>
    %92 = vector.multi_reduction <maximumf>, %91, %cst_28 [0] : vector<3x16xf32> to vector<16xf32>
    %93 = vector.shape_cast %92 : vector<16xf32> to vector<1x16xf32>
    %94 = vector.extract_strided_slice %90 {offsets = [3, 0], sizes = [3, 16], strides = [1, 1]} : vector<15x16xf32> to vector<3x16xf32>
    %cst_29 = arith.constant dense<0xFF800000> : vector<16xf32>
    %95 = vector.multi_reduction <maximumf>, %94, %cst_29 [0] : vector<3x16xf32> to vector<16xf32>
    %96 = vector.shape_cast %95 : vector<16xf32> to vector<1x16xf32>
    %97 = vector.extract_strided_slice %90 {offsets = [6, 0], sizes = [3, 16], strides = [1, 1]} : vector<15x16xf32> to vector<3x16xf32>
    %cst_30 = arith.constant dense<0xFF800000> : vector<16xf32>
    %98 = vector.multi_reduction <maximumf>, %97, %cst_30 [0] : vector<3x16xf32> to vector<16xf32>
    %99 = vector.shape_cast %98 : vector<16xf32> to vector<1x16xf32>
    %100 = vector.extract_strided_slice %90 {offsets = [9, 0], sizes = [3, 16], strides = [1, 1]} : vector<15x16xf32> to vector<3x16xf32>
    %cst_31 = arith.constant dense<0xFF800000> : vector<16xf32>
    %101 = vector.multi_reduction <maximumf>, %100, %cst_31 [0] : vector<3x16xf32> to vector<16xf32>
    %102 = vector.shape_cast %101 : vector<16xf32> to vector<1x16xf32>
    %103 = vector.extract_strided_slice %90 {offsets = [9, 0], sizes = [6, 16], strides = [1, 1]} : vector<15x16xf32> to vector<6x16xf32>
    %cst_32 = arith.constant dense<0xFF800000> : vector<16xf32>
    %104 = vector.multi_reduction <maximumf>, %103, %cst_32 [0] : vector<6x16xf32> to vector<16xf32>
    %105 = vector.shape_cast %104 : vector<16xf32> to vector<1x16xf32>
    %106 = tpu.concatenate %93, %96, %99, %102, %105 in 1 : vector<1x16xf32>, vector<1x16xf32>, vector<1x16xf32>, vector<1x16xf32>, vector<1x16xf32> -> vector<1x80xf32>
    %107 = vector.extract_strided_slice %0 {offsets = [4, 0, 0], sizes = [1, 16, 32], strides = [1, 1, 1]} : vector<8x16x32xf32> to vector<1x16x32xf32>
    %108 = vector.shape_cast %107 : vector<1x16x32xf32> to vector<16x32xf32>
    %109 = vector.extract_strided_slice %108 {offsets = [0, 0], sizes = [15, 32], strides = [1, 1]} : vector<16x32xf32> to vector<15x32xf32>
    %110 = vector.extract_strided_slice %108 {offsets = [1, 0], sizes = [15, 32], strides = [1, 1]} : vector<16x32xf32> to vector<15x32xf32>
    %111 = tpu.concatenate %109, %110 in 1 : vector<15x32xf32>, vector<15x32xf32> -> vector<15x64xf32>
    %cst_33 = arith.constant dense<0.000000e+00> : vector<15x16xf32>
    %112 = tpu.matmul %111, %1, %cst_33 {dimension_numbers = #tpu.dot_dimension_numbers<[1], [0], [0], [1], [0, 0, 1, 1], [], []>} : vector<15x64xf32>, vector<64x16xf32>, vector<15x16xf32> -> vector<15x16xf32>
    %113 = vector.broadcast %2 : vector<1x16xf32> to vector<15x16xf32>
    %114 = arith.addf %112, %113 : vector<15x16xf32>
    %cst_34 = arith.constant 0.000000e+00 : f32
    %115 = vector.broadcast %cst_34 : f32 to vector<15x16xf32>
    %116 = arith.maximumf %114, %115 : vector<15x16xf32>
    %117 = vector.extract_strided_slice %116 {offsets = [0, 0], sizes = [3, 16], strides = [1, 1]} : vector<15x16xf32> to vector<3x16xf32>
    %cst_35 = arith.constant dense<0xFF800000> : vector<16xf32>
    %118 = vector.multi_reduction <maximumf>, %117, %cst_35 [0] : vector<3x16xf32> to vector<16xf32>
    %119 = vector.shape_cast %118 : vector<16xf32> to vector<1x16xf32>
    %120 = vector.extract_strided_slice %116 {offsets = [3, 0], sizes = [3, 16], strides = [1, 1]} : vector<15x16xf32> to vector<3x16xf32>
    %cst_36 = arith.constant dense<0xFF800000> : vector<16xf32>
    %121 = vector.multi_reduction <maximumf>, %120, %cst_36 [0] : vector<3x16xf32> to vector<16xf32>
    %122 = vector.shape_cast %121 : vector<16xf32> to vector<1x16xf32>
    %123 = vector.extract_strided_slice %116 {offsets = [6, 0], sizes = [3, 16], strides = [1, 1]} : vector<15x16xf32> to vector<3x16xf32>
    %cst_37 = arith.constant dense<0xFF800000> : vector<16xf32>
    %124 = vector.multi_reduction <maximumf>, %123, %cst_37 [0] : vector<3x16xf32> to vector<16xf32>
    %125 = vector.shape_cast %124 : vector<16xf32> to vector<1x16xf32>
    %126 = vector.extract_strided_slice %116 {offsets = [9, 0], sizes = [3, 16], strides = [1, 1]} : vector<15x16xf32> to vector<3x16xf32>
    %cst_38 = arith.constant dense<0xFF800000> : vector<16xf32>
    %127 = vector.multi_reduction <maximumf>, %126, %cst_38 [0] : vector<3x16xf32> to vector<16xf32>
    %128 = vector.shape_cast %127 : vector<16xf32> to vector<1x16xf32>
    %129 = vector.extract_strided_slice %116 {offsets = [9, 0], sizes = [6, 16], strides = [1, 1]} : vector<15x16xf32> to vector<6x16xf32>
    %cst_39 = arith.constant dense<0xFF800000> : vector<16xf32>
    %130 = vector.multi_reduction <maximumf>, %129, %cst_39 [0] : vector<6x16xf32> to vector<16xf32>
    %131 = vector.shape_cast %130 : vector<16xf32> to vector<1x16xf32>
    %132 = tpu.concatenate %119, %122, %125, %128, %131 in 1 : vector<1x16xf32>, vector<1x16xf32>, vector<1x16xf32>, vector<1x16xf32>, vector<1x16xf32> -> vector<1x80xf32>
    %133 = vector.extract_strided_slice %0 {offsets = [5, 0, 0], sizes = [1, 16, 32], strides = [1, 1, 1]} : vector<8x16x32xf32> to vector<1x16x32xf32>
    %134 = vector.shape_cast %133 : vector<1x16x32xf32> to vector<16x32xf32>
    %135 = vector.extract_strided_slice %134 {offsets = [0, 0], sizes = [15, 32], strides = [1, 1]} : vector<16x32xf32> to vector<15x32xf32>
    %136 = vector.extract_strided_slice %134 {offsets = [1, 0], sizes = [15, 32], strides = [1, 1]} : vector<16x32xf32> to vector<15x32xf32>
    %137 = tpu.concatenate %135, %136 in 1 : vector<15x32xf32>, vector<15x32xf32> -> vector<15x64xf32>
    %cst_40 = arith.constant dense<0.000000e+00> : vector<15x16xf32>
    %138 = tpu.matmul %137, %1, %cst_40 {dimension_numbers = #tpu.dot_dimension_numbers<[1], [0], [0], [1], [0, 0, 1, 1], [], []>} : vector<15x64xf32>, vector<64x16xf32>, vector<15x16xf32> -> vector<15x16xf32>
    %139 = vector.broadcast %2 : vector<1x16xf32> to vector<15x16xf32>
    %140 = arith.addf %138, %139 : vector<15x16xf32>
    %cst_41 = arith.constant 0.000000e+00 : f32
    %141 = vector.broadcast %cst_41 : f32 to vector<15x16xf32>
    %142 = arith.maximumf %140, %141 : vector<15x16xf32>
    %143 = vector.extract_strided_slice %142 {offsets = [0, 0], sizes = [3, 16], strides = [1, 1]} : vector<15x16xf32> to vector<3x16xf32>
    %cst_42 = arith.constant dense<0xFF800000> : vector<16xf32>
    %144 = vector.multi_reduction <maximumf>, %143, %cst_42 [0] : vector<3x16xf32> to vector<16xf32>
    %145 = vector.shape_cast %144 : vector<16xf32> to vector<1x16xf32>
    %146 = vector.extract_strided_slice %142 {offsets = [3, 0], sizes = [3, 16], strides = [1, 1]} : vector<15x16xf32> to vector<3x16xf32>
    %cst_43 = arith.constant dense<0xFF800000> : vector<16xf32>
    %147 = vector.multi_reduction <maximumf>, %146, %cst_43 [0] : vector<3x16xf32> to vector<16xf32>
    %148 = vector.shape_cast %147 : vector<16xf32> to vector<1x16xf32>
    %149 = vector.extract_strided_slice %142 {offsets = [6, 0], sizes = [3, 16], strides = [1, 1]} : vector<15x16xf32> to vector<3x16xf32>
    %cst_44 = arith.constant dense<0xFF800000> : vector<16xf32>
    %150 = vector.multi_reduction <maximumf>, %149, %cst_44 [0] : vector<3x16xf32> to vector<16xf32>
    %151 = vector.shape_cast %150 : vector<16xf32> to vector<1x16xf32>
    %152 = vector.extract_strided_slice %142 {offsets = [9, 0], sizes = [3, 16], strides = [1, 1]} : vector<15x16xf32> to vector<3x16xf32>
    %cst_45 = arith.constant dense<0xFF800000> : vector<16xf32>
    %153 = vector.multi_reduction <maximumf>, %152, %cst_45 [0] : vector<3x16xf32> to vector<16xf32>
    %154 = vector.shape_cast %153 : vector<16xf32> to vector<1x16xf32>
    %155 = vector.extract_strided_slice %142 {offsets = [9, 0], sizes = [6, 16], strides = [1, 1]} : vector<15x16xf32> to vector<6x16xf32>
    %cst_46 = arith.constant dense<0xFF800000> : vector<16xf32>
    %156 = vector.multi_reduction <maximumf>, %155, %cst_46 [0] : vector<6x16xf32> to vector<16xf32>
    %157 = vector.shape_cast %156 : vector<16xf32> to vector<1x16xf32>
    %158 = tpu.concatenate %145, %148, %151, %154, %157 in 1 : vector<1x16xf32>, vector<1x16xf32>, vector<1x16xf32>, vector<1x16xf32>, vector<1x16xf32> -> vector<1x80xf32>
    %159 = vector.extract_strided_slice %0 {offsets = [6, 0, 0], sizes = [1, 16, 32], strides = [1, 1, 1]} : vector<8x16x32xf32> to vector<1x16x32xf32>
    %160 = vector.shape_cast %159 : vector<1x16x32xf32> to vector<16x32xf32>
    %161 = vector.extract_strided_slice %160 {offsets = [0, 0], sizes = [15, 32], strides = [1, 1]} : vector<16x32xf32> to vector<15x32xf32>
    %162 = vector.extract_strided_slice %160 {offsets = [1, 0], sizes = [15, 32], strides = [1, 1]} : vector<16x32xf32> to vector<15x32xf32>
    %163 = tpu.concatenate %161, %162 in 1 : vector<15x32xf32>, vector<15x32xf32> -> vector<15x64xf32>
    %cst_47 = arith.constant dense<0.000000e+00> : vector<15x16xf32>
    %164 = tpu.matmul %163, %1, %cst_47 {dimension_numbers = #tpu.dot_dimension_numbers<[1], [0], [0], [1], [0, 0, 1, 1], [], []>} : vector<15x64xf32>, vector<64x16xf32>, vector<15x16xf32> -> vector<15x16xf32>
    %165 = vector.broadcast %2 : vector<1x16xf32> to vector<15x16xf32>
    %166 = arith.addf %164, %165 : vector<15x16xf32>
    %cst_48 = arith.constant 0.000000e+00 : f32
    %167 = vector.broadcast %cst_48 : f32 to vector<15x16xf32>
    %168 = arith.maximumf %166, %167 : vector<15x16xf32>
    %169 = vector.extract_strided_slice %168 {offsets = [0, 0], sizes = [3, 16], strides = [1, 1]} : vector<15x16xf32> to vector<3x16xf32>
    %cst_49 = arith.constant dense<0xFF800000> : vector<16xf32>
    %170 = vector.multi_reduction <maximumf>, %169, %cst_49 [0] : vector<3x16xf32> to vector<16xf32>
    %171 = vector.shape_cast %170 : vector<16xf32> to vector<1x16xf32>
    %172 = vector.extract_strided_slice %168 {offsets = [3, 0], sizes = [3, 16], strides = [1, 1]} : vector<15x16xf32> to vector<3x16xf32>
    %cst_50 = arith.constant dense<0xFF800000> : vector<16xf32>
    %173 = vector.multi_reduction <maximumf>, %172, %cst_50 [0] : vector<3x16xf32> to vector<16xf32>
    %174 = vector.shape_cast %173 : vector<16xf32> to vector<1x16xf32>
    %175 = vector.extract_strided_slice %168 {offsets = [6, 0], sizes = [3, 16], strides = [1, 1]} : vector<15x16xf32> to vector<3x16xf32>
    %cst_51 = arith.constant dense<0xFF800000> : vector<16xf32>
    %176 = vector.multi_reduction <maximumf>, %175, %cst_51 [0] : vector<3x16xf32> to vector<16xf32>
    %177 = vector.shape_cast %176 : vector<16xf32> to vector<1x16xf32>
    %178 = vector.extract_strided_slice %168 {offsets = [9, 0], sizes = [3, 16], strides = [1, 1]} : vector<15x16xf32> to vector<3x16xf32>
    %cst_52 = arith.constant dense<0xFF800000> : vector<16xf32>
    %179 = vector.multi_reduction <maximumf>, %178, %cst_52 [0] : vector<3x16xf32> to vector<16xf32>
    %180 = vector.shape_cast %179 : vector<16xf32> to vector<1x16xf32>
    %181 = vector.extract_strided_slice %168 {offsets = [9, 0], sizes = [6, 16], strides = [1, 1]} : vector<15x16xf32> to vector<6x16xf32>
    %cst_53 = arith.constant dense<0xFF800000> : vector<16xf32>
    %182 = vector.multi_reduction <maximumf>, %181, %cst_53 [0] : vector<6x16xf32> to vector<16xf32>
    %183 = vector.shape_cast %182 : vector<16xf32> to vector<1x16xf32>
    %184 = tpu.concatenate %171, %174, %177, %180, %183 in 1 : vector<1x16xf32>, vector<1x16xf32>, vector<1x16xf32>, vector<1x16xf32>, vector<1x16xf32> -> vector<1x80xf32>
    %185 = vector.extract_strided_slice %0 {offsets = [7, 0, 0], sizes = [1, 16, 32], strides = [1, 1, 1]} : vector<8x16x32xf32> to vector<1x16x32xf32>
    %186 = vector.shape_cast %185 : vector<1x16x32xf32> to vector<16x32xf32>
    %187 = vector.extract_strided_slice %186 {offsets = [0, 0], sizes = [15, 32], strides = [1, 1]} : vector<16x32xf32> to vector<15x32xf32>
    %188 = vector.extract_strided_slice %186 {offsets = [1, 0], sizes = [15, 32], strides = [1, 1]} : vector<16x32xf32> to vector<15x32xf32>
    %189 = tpu.concatenate %187, %188 in 1 : vector<15x32xf32>, vector<15x32xf32> -> vector<15x64xf32>
    %cst_54 = arith.constant dense<0.000000e+00> : vector<15x16xf32>
    %190 = tpu.matmul %189, %1, %cst_54 {dimension_numbers = #tpu.dot_dimension_numbers<[1], [0], [0], [1], [0, 0, 1, 1], [], []>} : vector<15x64xf32>, vector<64x16xf32>, vector<15x16xf32> -> vector<15x16xf32>
    %191 = vector.broadcast %2 : vector<1x16xf32> to vector<15x16xf32>
    %192 = arith.addf %190, %191 : vector<15x16xf32>
    %cst_55 = arith.constant 0.000000e+00 : f32
    %193 = vector.broadcast %cst_55 : f32 to vector<15x16xf32>
    %194 = arith.maximumf %192, %193 : vector<15x16xf32>
    %195 = vector.extract_strided_slice %194 {offsets = [0, 0], sizes = [3, 16], strides = [1, 1]} : vector<15x16xf32> to vector<3x16xf32>
    %cst_56 = arith.constant dense<0xFF800000> : vector<16xf32>
    %196 = vector.multi_reduction <maximumf>, %195, %cst_56 [0] : vector<3x16xf32> to vector<16xf32>
    %197 = vector.shape_cast %196 : vector<16xf32> to vector<1x16xf32>
    %198 = vector.extract_strided_slice %194 {offsets = [3, 0], sizes = [3, 16], strides = [1, 1]} : vector<15x16xf32> to vector<3x16xf32>
    %cst_57 = arith.constant dense<0xFF800000> : vector<16xf32>
    %199 = vector.multi_reduction <maximumf>, %198, %cst_57 [0] : vector<3x16xf32> to vector<16xf32>
    %200 = vector.shape_cast %199 : vector<16xf32> to vector<1x16xf32>
    %201 = vector.extract_strided_slice %194 {offsets = [6, 0], sizes = [3, 16], strides = [1, 1]} : vector<15x16xf32> to vector<3x16xf32>
    %cst_58 = arith.constant dense<0xFF800000> : vector<16xf32>
    %202 = vector.multi_reduction <maximumf>, %201, %cst_58 [0] : vector<3x16xf32> to vector<16xf32>
    %203 = vector.shape_cast %202 : vector<16xf32> to vector<1x16xf32>
    %204 = vector.extract_strided_slice %194 {offsets = [9, 0], sizes = [3, 16], strides = [1, 1]} : vector<15x16xf32> to vector<3x16xf32>
    %cst_59 = arith.constant dense<0xFF800000> : vector<16xf32>
    %205 = vector.multi_reduction <maximumf>, %204, %cst_59 [0] : vector<3x16xf32> to vector<16xf32>
    %206 = vector.shape_cast %205 : vector<16xf32> to vector<1x16xf32>
    %207 = vector.extract_strided_slice %194 {offsets = [9, 0], sizes = [6, 16], strides = [1, 1]} : vector<15x16xf32> to vector<6x16xf32>
    %cst_60 = arith.constant dense<0xFF800000> : vector<16xf32>
    %208 = vector.multi_reduction <maximumf>, %207, %cst_60 [0] : vector<6x16xf32> to vector<16xf32>
    %209 = vector.shape_cast %208 : vector<16xf32> to vector<1x16xf32>
    %210 = tpu.concatenate %197, %200, %203, %206, %209 in 1 : vector<1x16xf32>, vector<1x16xf32>, vector<1x16xf32>, vector<1x16xf32>, vector<1x16xf32> -> vector<1x80xf32>
    %211 = tpu.concatenate %28, %54, %80, %106, %132, %158, %184, %210 in 0 : vector<1x80xf32>, vector<1x80xf32>, vector<1x80xf32>, vector<1x80xf32>, vector<1x80xf32>, vector<1x80xf32>, vector<1x80xf32>, vector<1x80xf32> -> vector<8x80xf32>
    %c0_61 = arith.constant 0 : index
    %c0_62 = arith.constant 0 : index
    %212 = vector.load %arg4[%c0_61, %c0_62] : memref<80x10xf32, #tpu.memory_space<vmem>>, vector<80x10xf32>
    %cst_63 = arith.constant dense<0.000000e+00> : vector<8x10xf32>
    %213 = tpu.matmul %211, %212, %cst_63 {dimension_numbers = #tpu.dot_dimension_numbers<[1], [0], [0], [1], [0, 0, 1, 1], [], []>} : vector<8x80xf32>, vector<80x10xf32>, vector<8x10xf32> -> vector<8x10xf32>
    %c0_64 = arith.constant 0 : index
    %c0_65 = arith.constant 0 : index
    %214 = vector.load %arg5[%c0_64, %c0_65] : memref<1x10xf32, #tpu.memory_space<vmem>>, vector<1x10xf32>
    %215 = vector.broadcast %214 : vector<1x10xf32> to vector<8x10xf32>
    %216 = arith.addf %213, %215 : vector<8x10xf32>
    %217 = arith.negf %216 : vector<8x10xf32>
    %218 = math.exp %217 : vector<8x10xf32>
    %cst_66 = arith.constant 1.000000e+00 : f32
    %219 = vector.broadcast %cst_66 : f32 to vector<8x10xf32>
    %220 = arith.addf %219, %218 : vector<8x10xf32>
    %221 = arith.divf %219, %220 : vector<8x10xf32>
    %c0_67 = arith.constant 0 : index
    %c0_68 = arith.constant 0 : index
    %222 = vector.load %arg6[%c0_67, %c0_68] : memref<10x10xf32, #tpu.memory_space<vmem>>, vector<10x10xf32>
    %cst_69 = arith.constant dense<0.000000e+00> : vector<8x10xf32>
    %223 = tpu.matmul %221, %222, %cst_69 {dimension_numbers = #tpu.dot_dimension_numbers<[1], [0], [0], [1], [0, 0, 1, 1], [], []>} : vector<8x10xf32>, vector<10x10xf32>, vector<8x10xf32> -> vector<8x10xf32>
    %c0_70 = arith.constant 0 : index
    %c0_71 = arith.constant 0 : index
    %224 = vector.load %arg7[%c0_70, %c0_71] : memref<1x10xf32, #tpu.memory_space<vmem>>, vector<1x10xf32>
    %225 = vector.broadcast %224 : vector<1x10xf32> to vector<8x10xf32>
    %226 = arith.addf %223, %225 : vector<8x10xf32>
    %227 = arith.negf %226 : vector<8x10xf32>
    %228 = math.exp %227 : vector<8x10xf32>
    %cst_72 = arith.constant 1.000000e+00 : f32
    %229 = vector.broadcast %cst_72 : f32 to vector<8x10xf32>
    %230 = arith.addf %229, %228 : vector<8x10xf32>
    %231 = arith.divf %229, %230 : vector<8x10xf32>
    %c0_73 = arith.constant 0 : index
    %c0_74 = arith.constant 0 : index
    %232 = vector.load %arg8[%c0_73, %c0_74] : memref<10x128xf32, #tpu.memory_space<vmem>>, vector<10x128xf32>
    %cst_75 = arith.constant dense<0.000000e+00> : vector<8x128xf32>
    %233 = tpu.matmul %231, %232, %cst_75 {dimension_numbers = #tpu.dot_dimension_numbers<[1], [0], [0], [1], [0, 0, 1, 1], [], []>} : vector<8x10xf32>, vector<10x128xf32>, vector<8x128xf32> -> vector<8x128xf32>
    %c0_76 = arith.constant 0 : index
    %c0_77 = arith.constant 0 : index
    %234 = vector.load %arg9[%c0_76, %c0_77] : memref<1x128xf32, #tpu.memory_space<vmem>>, vector<1x128xf32>
    %235 = vector.broadcast %234 : vector<1x128xf32> to vector<8x128xf32>
    %236 = arith.addf %233, %235 : vector<8x128xf32>
    %cst_78 = arith.constant dense<0xFF800000> : vector<8xf32>
    %237 = vector.multi_reduction <maximumf>, %236, %cst_78 [1] : vector<8x128xf32> to vector<8xf32>
    %238 = vector.shape_cast %237 : vector<8xf32> to vector<8x1xf32>
    %239 = vector.broadcast %238 : vector<8x1xf32> to vector<8x128xf32>
    %240 = arith.subf %236, %239 : vector<8x128xf32>
    %241 = math.exp %240 : vector<8x128xf32>
    %cst_79 = arith.constant dense<0.000000e+00> : vector<8xf32>
    %242 = vector.multi_reduction <add>, %241, %cst_79 [1] : vector<8x128xf32> to vector<8xf32>
    %243 = vector.shape_cast %242 : vector<8xf32> to vector<8x1xf32>
    %244 = vector.broadcast %243 : vector<8x1xf32> to vector<8x128xf32>
    %245 = arith.divf %241, %244 : vector<8x128xf32>
    %c0_80 = arith.constant 0 : index
    %c0_81 = arith.constant 0 : index
    %246 = vector.load %arg10[%c0_80, %c0_81] : memref<8x128xf32, #tpu.memory_space<vmem>>, vector<8x128xf32>
    tpu.vector_store %arg10[%c0_80, %c0_81], %245 {strides = array<i32>} : memref<8x128xf32, #tpu.memory_space<vmem>>, vector<8x128xf32>,
    return
  }
  func.func @transform_0(%arg0: i32) -> (i32, i32, i32) {
    %c0_i32 = arith.constant 0 : i32
    %c0_i32_0 = arith.constant 0 : i32
    %c0_i32_1 = arith.constant 0 : i32
    return %arg0, %c0_i32, %c0_i32_0 : i32, i32, i32
  }
  func.func @transform_1(%arg0: i32) -> (i32, i32) {
    %c0_i32 = arith.constant 0 : i32
    %c0_i32_0 = arith.constant 0 : i32
    %c0_i32_1 = arith.constant 0 : i32
    return %c0_i32, %c0_i32_0 : i32, i32
  }
  func.func @transform_2(%arg0: i32) -> (i32, i32) {
    %c0_i32 = arith.constant 0 : i32
    %c0_i32_0 = arith.constant 0 : i32
    %c0_i32_1 = arith.constant 0 : i32
    return %c0_i32, %c0_i32_0 : i32, i32
  }
  func.func @transform_3(%arg0: i32) -> (i32, i32) {
    %c0_i32 = arith.constant 0 : i32
    %c0_i32_0 = arith.constant 0 : i32
    %c0_i32_1 = arith.constant 0 : i32
    return %c0_i32, %c0_i32_0 : i32, i32
  }
  func.func @transform_4(%arg0: i32) -> (i32, i32) {
    %c0_i32 = arith.constant 0 : i32
    %c0_i32_0 = arith.constant 0 : i32
    %c0_i32_1 = arith.constant 0 : i32
    return %c0_i32, %c0_i32_0 : i32, i32
  }
  func.func @transform_5(%arg0: i32) -> (i32, i32) {
    %c0_i32 = arith.constant 0 : i32
    %c0_i32_0 = arith.constant 0 : i32
    %c0_i32_1 = arith.constant 0 : i32
    return %c0_i32, %c0_i32_0 : i32, i32
  }
  func.func @transform_6(%arg0: i32) -> (i32, i32) {
    %c0_i32 = arith.constant 0 : i32
    %c0_i32_0 = arith.constant 0 : i32
    %c0_i32_1 = arith.constant 0 : i32
    return %c0_i32, %c0_i32_0 : i32, i32
  }
  func.func @transform_7(%arg0: i32) -> (i32, i32) {
    %c0_i32 = arith.constant 0 : i32
    %c0_i32_0 = arith.constant 0 : i32
    %c0_i32_1 = arith.constant 0 : i32
    return %c0_i32, %c0_i32_0 : i32, i32
  }
  func.func @transform_8(%arg0: i32) -> (i32, i32) {
    %c0_i32 = arith.constant 0 : i32
    %c0_i32_0 = arith.constant 0 : i32
    %c0_i32_1 = arith.constant 0 : i32
    return %c0_i32, %c0_i32_0 : i32, i32
  }
  func.func @transform_9(%arg0: i32) -> (i32, i32) {
    %c0_i32 = arith.constant 0 : i32
    %c0_i32_0 = arith.constant 0 : i32
    return %arg0, %c0_i32 : i32, i32
  }
}

</mosaic_0001>

<llo_original>
// kernel: tpu_custom_call.1
$region0: #{tpu_custom_call.1}
  #allocation0 [shape = 'u32[]', space=smem, size = 0x4, offset = 0x4, fixed_abs, tag = 'smem constant byte address 0x4 - core index']
  #allocation1 [shape = 'u32[72,128]{1,0:T(1,128)}', space=vmem, size = 0x9000, scoped, tag = 'internal scratch']
  %s0 = inlined_call_operand.hbm [shape: f32[16,16,32], index: 0, kind: input, shape index: {}]
  %s1 = inlined_call_operand.vmem [shape: f32[64,16], index: 1, kind: input, shape index: {}]
  %s2 = inlined_call_operand.vmem [shape: f32[1,16], index: 2, kind: input, shape index: {}]
  %s3 = inlined_call_operand.vmem [shape: f32[80,10], index: 3, kind: input, shape index: {}]
  %s4 = inlined_call_operand.vmem [shape: f32[1,10], index: 4, kind: input, shape index: {}]
  %s5 = inlined_call_operand.vmem [shape: f32[10,10], index: 5, kind: input, shape index: {}]
  %s6 = inlined_call_operand.vmem [shape: f32[1,10], index: 6, kind: input, shape index: {}]
  %s7 = inlined_call_operand.vmem [shape: f32[10,128], index: 7, kind: input, shape index: {}]
  %s8 = inlined_call_operand.vmem [shape: f32[1,128], index: 8, kind: input, shape index: {}]
  %s9 = inlined_call_operand.hbm [shape: f32[16,128], index: 9, kind: output, shape index: {}]
  %s10 = sld [smem:[#allocation0]]
  $region73: #{tpu_custom_call.1} parent=0
    _
  %s12 = ssub.s32 1, %s10
  %s13 = scalar_select 0, %s12, %s10
  $region1: #{tpu_custom_call.1} parent=0
    #allocation2 [shape = 'u8[131072]{0}', space=vmem, size = 0x20000, scoped, tag = 'input window, operand 0']
    #allocation3 [shape = 's32[2]{0}', space=sflag, size = 0x8, scoped, tag = 'scoped memory for tpu_custom_call.1']
    #allocation4 [shape = 's32[2]{0}', space=sflag, size = 0x8, scoped, tag = 'scoped memory for tpu_custom_call.1']
    #allocation5 [shape = 'u8[8192]{0}', space=vmem, size = 0x2000, scoped, tag = 'output window, operand 0']
    %14 = vsyncpa [#allocation3], 0
    %s15 = scalar_lea.sflag [#allocation3], 1
    %16 = vsyncpa %s15, 0
    %17 = vsyncpa [#allocation4], 0
    %s18 = scalar_lea.sflag [#allocation4], 1
    %19 = vsyncpa %s18, 0
    loop: start=0, step=1, limit=4
    $region2: #{tpu_custom_call.1} parent=1 // loop_pre_header
      _
    $region3: #{tpu_custom_call.1} parent=1 // loop_header
      %s21 = sphi 0, %s25
      %p22 = scmp.ge.s32.totalorder %s21, 4
      %s31 = sphi 0, %s33
      %s34 = sphi 0, %s31
      %s35 = sphi 0, %s34
      %s51 = sphi 0, %s35
      %s55 = sphi 0, %s55
      %s57 = sphi 0, %s55
      %s58 = sphi 0, %s57
      %s72 = sphi 0, %s58
      %s76 = sphi 0, %s76
      %s78 = sphi 0, %s76
      %s79 = sphi 0, %s78
      %s93 = sphi 0, %s79
      %s97 = sphi 0, %s97
      %s99 = sphi 0, %s97
      %s100 = sphi 0, %s99
      %s114 = sphi 0, %s100
      %s118 = sphi 0, %s118
      %s120 = sphi 0, %s118
      %s121 = sphi 0, %s120
      %s135 = sphi 0, %s121
      %s139 = sphi 0, %s139
      %s141 = sphi 0, %s139
      %s142 = sphi 0, %s141
      %s156 = sphi 0, %s142
      %s160 = sphi 0, %s160
      %s162 = sphi 0, %s160
      %s163 = sphi 0, %s162
      %s177 = sphi 0, %s163
      %s181 = sphi 0, %s181
      %s183 = sphi 0, %s181
      %s184 = sphi 0, %s183
      %s198 = sphi 0, %s184
      %s202 = sphi 0, %s202
      %s204 = sphi 0, %s202
      %s205 = sphi 0, %s204
      %s219 = sphi 0, %s205
      %s225 = sphi 0, %s227
      %s228 = sphi 0, %s225
      %s229 = sphi 0, %s228
      %s245 = sphi 0, %s229
    $region4: #{tpu_custom_call.1} parent=1 // loop_header_branch
      %24 = sbr.rel (%p22) target = $region8
    $region5: #{tpu_custom_call.1} parent=1 // loop_body
      %s26 = ssub.s32 %s21, 1
      %s27 = ssub.s32 %s21, 2
      %s28 = sadd.s32 %s21, 1
      %s29 = ssub.s32 %s21, %s28
      %p30 = scmp.eq.s32.totalorder %s29, 0
      %s32 = sadd.s32 %s31, 1
      %s33 = scalar_select %p30, %s31, %s32
      %p36 = pneg %p30
      %p37 = scmp.eq.s32.totalorder %s21, 1
      %p38 = por %p36, %p37
      %p39 = scmp.ne.s32.totalorder %s31, %s34
      %p40 = scmp.eq.s32.totalorder %s21, 0
      %p41 = por %p39, %p40
      %p42 = scmp.ne.s32.totalorder %s31, %s34
      %p43 = scmp.eq.s32.totalorder %s26, 1
      %p44 = por %p42, %p43
      %p45 = scmp.ne.s32.totalorder %s34, %s35
      %p46 = scmp.eq.s32.totalorder %s26, 0
      %p47 = por %p45, %p46
      %p48 = scmp.ne.s32.totalorder %s34, %s35
      %p49 = scmp.eq.s32.totalorder %s27, 1
      %p50 = por %p48, %p49
      %p52 = scmp.ne.s32.totalorder %s35, %s51
      %p53 = scmp.eq.s32.totalorder %s27, 0
      %p54 = por %p52, %p53
      %s56 = sadd.s32 %s55, 1
      %p59 = scmp.eq.s32.totalorder %s21, 1
      %p60 = scmp.ne.s32.totalorder %s55, %s57
      %p61 = scmp.eq.s32.totalorder %s21, 0
      %p62 = por %p60, %p61
      %p63 = scmp.ne.s32.totalorder %s55, %s57
      %p64 = scmp.eq.s32.totalorder %s26, 1
      %p65 = por %p63, %p64
      %p66 = scmp.ne.s32.totalorder %s57, %s58
      %p67 = scmp.eq.s32.totalorder %s26, 0
      %p68 = por %p66, %p67
      %p69 = scmp.ne.s32.totalorder %s57, %s58
      %p70 = scmp.eq.s32.totalorder %s27, 1
      %p71 = por %p69, %p70
      %p73 = scmp.ne.s32.totalorder %s58, %s72
      %p74 = scmp.eq.s32.totalorder %s27, 0
      %p75 = por %p73, %p74
      %s77 = sadd.s32 %s76, 1
      %p80 = scmp.eq.s32.totalorder %s21, 1
      %p81 = scmp.ne.s32.totalorder %s76, %s78
      %p82 = scmp.eq.s32.totalorder %s21, 0
      %p83 = por %p81, %p82
      %p84 = scmp.ne.s32.totalorder %s76, %s78
      %p85 = scmp.eq.s32.totalorder %s26, 1
      %p86 = por %p84, %p85
      %p87 = scmp.ne.s32.totalorder %s78, %s79
      %p88 = scmp.eq.s32.totalorder %s26, 0
      %p89 = por %p87, %p88
      %p90 = scmp.ne.s32.totalorder %s78, %s79
      %p91 = scmp.eq.s32.totalorder %s27, 1
      %p92 = por %p90, %p91
      %p94 = scmp.ne.s32.totalorder %s79, %s93
      %p95 = scmp.eq.s32.totalorder %s27, 0
      %p96 = por %p94, %p95
      %s98 = sadd.s32 %s97, 1
      %p101 = scmp.eq.s32.totalorder %s21, 1
      %p102 = scmp.ne.s32.totalorder %s97, %s99
      %p103 = scmp.eq.s32.totalorder %s21, 0
      %p104 = por %p102, %p103
      %p105 = scmp.ne.s32.totalorder %s97, %s99
      %p106 = scmp.eq.s32.totalorder %s26, 1
      %p107 = por %p105, %p106
      %p108 = scmp.ne.s32.totalorder %s99, %s100
      %p109 = scmp.eq.s32.totalorder %s26, 0
      %p110 = por %p108, %p109
      %p111 = scmp.ne.s32.totalorder %s99, %s100
      %p112 = scmp.eq.s32.totalorder %s27, 1
      %p113 = por %p111, %p112
      %p115 = scmp.ne.s32.totalorder %s100, %s114
      %p116 = scmp.eq.s32.totalorder %s27, 0
      %p117 = por %p115, %p116
      %s119 = sadd.s32 %s118, 1
      %p122 = scmp.eq.s32.totalorder %s21, 1
      %p123 = scmp.ne.s32.totalorder %s118, %s120
      %p124 = scmp.eq.s32.totalorder %s21, 0
      %p125 = por %p123, %p124
      %p126 = scmp.ne.s32.totalorder %s118, %s120
      %p127 = scmp.eq.s32.totalorder %s26, 1
      %p128 = por %p126, %p127
      %p129 = scmp.ne.s32.totalorder %s120, %s121
      %p130 = scmp.eq.s32.totalorder %s26, 0
      %p131 = por %p129, %p130
      %p132 = scmp.ne.s32.totalorder %s120, %s121
      %p133 = scmp.eq.s32.totalorder %s27, 1
      %p134 = por %p132, %p133
      %p136 = scmp.ne.s32.totalorder %s121, %s135
      %p137 = scmp.eq.s32.totalorder %s27, 0
      %p138 = por %p136, %p137
      %s140 = sadd.s32 %s139, 1
      %p143 = scmp.eq.s32.totalorder %s21, 1
      %p144 = scmp.ne.s32.totalorder %s139, %s141
      %p145 = scmp.eq.s32.totalorder %s21, 0
      %p146 = por %p144, %p145
      %p147 = scmp.ne.s32.totalorder %s139, %s141
      %p148 = scmp.eq.s32.totalorder %s26, 1
      %p149 = por %p147, %p148
      %p150 = scmp.ne.s32.totalorder %s141, %s142
      %p151 = scmp.eq.s32.totalorder %s26, 0
      %p152 = por %p150, %p151
      %p153 = scmp.ne.s32.totalorder %s141, %s142
      %p154 = scmp.eq.s32.totalorder %s27, 1
      %p155 = por %p153, %p154
      %p157 = scmp.ne.s32.totalorder %s142, %s156
      %p158 = scmp.eq.s32.totalorder %s27, 0
      %p159 = por %p157, %p158
      %s161 = sadd.s32 %s160, 1
      %p164 = scmp.eq.s32.totalorder %s21, 1
      %p165 = scmp.ne.s32.totalorder %s160, %s162
      %p166 = scmp.eq.s32.totalorder %s21, 0
      %p167 = por %p165, %p166
      %p168 = scmp.ne.s32.totalorder %s160, %s162
      %p169 = scmp.eq.s32.totalorder %s26, 1
      %p170 = por %p168, %p169
      %p171 = scmp.ne.s32.totalorder %s162, %s163
      %p172 = scmp.eq.s32.totalorder %s26, 0
      %p173 = por %p171, %p172
      %p174 = scmp.ne.s32.totalorder %s162, %s163
      %p175 = scmp.eq.s32.totalorder %s27, 1
      %p176 = por %p174, %p175
      %p178 = scmp.ne.s32.totalorder %s163, %s177
      %p179 = scmp.eq.s32.totalorder %s27, 0
      %p180 = por %p178, %p179
      %s182 = sadd.s32 %s181, 1
      %p185 = scmp.eq.s32.totalorder %s21, 1
      %p186 = scmp.ne.s32.totalorder %s181, %s183
      %p187 = scmp.eq.s32.totalorder %s21, 0
      %p188 = por %p186, %p187
      %p189 = scmp.ne.s32.totalorder %s181, %s183
      %p190 = scmp.eq.s32.totalorder %s26, 1
      %p191 = por %p189, %p190
      %p192 = scmp.ne.s32.totalorder %s183, %s184
      %p193 = scmp.eq.s32.totalorder %s26, 0
      %p194 = por %p192, %p193
      %p195 = scmp.ne.s32.totalorder %s183, %s184
      %p196 = scmp.eq.s32.totalorder %s27, 1
      %p197 = por %p195, %p196
      %p199 = scmp.ne.s32.totalorder %s184, %s198
      %p200 = scmp.eq.s32.totalorder %s27, 0
      %p201 = por %p199, %p200
      %s203 = sadd.s32 %s202, 1
      %p206 = scmp.eq.s32.totalorder %s21, 1
      %p207 = scmp.ne.s32.totalorder %s202, %s204
      %p208 = scmp.eq.s32.totalorder %s21, 0
      %p209 = por %p207, %p208
      %p210 = scmp.ne.s32.totalorder %s202, %s204
      %p211 = scmp.eq.s32.totalorder %s26, 1
      %p212 = por %p210, %p211
      %p213 = scmp.ne.s32.totalorder %s204, %s205
      %p214 = scmp.eq.s32.totalorder %s26, 0
      %p215 = por %p213, %p214
      %p216 = scmp.ne.s32.totalorder %s204, %s205
      %p217 = scmp.eq.s32.totalorder %s27, 1
      %p218 = por %p216, %p217
      %p220 = scmp.ne.s32.totalorder %s205, %s219
      %p221 = scmp.eq.s32.totalorder %s27, 0
      %p222 = por %p220, %p221
      %s223 = ssub.s32 %s21, %s28
      %p224 = scmp.eq.s32.totalorder %s223, 0
      %s226 = sadd.s32 %s225, 1
      %s227 = scalar_select %p224, %s225, %s226
      %p230 = pneg %p224
      %p231 = scmp.eq.s32.totalorder %s21, 1
      %p232 = por %p230, %p231
      %p233 = scmp.ne.s32.totalorder %s225, %s228
      %p234 = scmp.eq.s32.totalorder %s21, 0
      %p235 = por %p233, %p234
      %p236 = scmp.ne.s32.totalorder %s225, %s228
      %p237 = scmp.eq.s32.totalorder %s26, 1
      %p238 = por %p236, %p237
      %p239 = scmp.ne.s32.totalorder %s228, %s229
      %p240 = scmp.eq.s32.totalorder %s26, 0
      %p241 = por %p239, %p240
      %p242 = scmp.ne.s32.totalorder %s228, %s229
      %p243 = scmp.eq.s32.totalorder %s27, 1
      %p244 = por %p242, %p243
      %p246 = scmp.ne.s32.totalorder %s229, %s245
      %p247 = scmp.eq.s32.totalorder %s27, 0
      %p248 = por %p246, %p247
      %p249 = scmp.le.s32.totalorder 1, %s21
      %p250 = scmp.lt.s32.totalorder %s21, 3
      %p251 = pnand %p249, %p250
      %p252 = pneg %p251
      // Predicated region
      $region9: #{tpu_custom_call.1} parent=5 // pred_check
        _
      $region10: #{tpu_custom_call.1} parent=5 // pred_check_branch
        %254 = sbr.rel (%p251) target = $region12
      $region11: #{tpu_custom_call.1} parent=5 // pred_region
        %s255 = ssub.s32 %s21, 1
        // Predicated region
        $region13: #{tpu_custom_call.1} parent=11 // pred_check
          %p256 = pneg %p68
        $region14: #{tpu_custom_call.1} parent=11 // pred_check_branch
          %258 = sbr.rel (%p256) target = $region16
        $region15: #{tpu_custom_call.1} parent=11 // pred_region
          _
        $region16: #{tpu_custom_call.1} parent=11 // pred_fallthru
          _
        // Predicated region
        $region17: #{tpu_custom_call.1} parent=11 // pred_check
          %p259 = pneg %p89
        $region18: #{tpu_custom_call.1} parent=11 // pred_check_branch
          %261 = sbr.rel (%p259) target = $region20
        $region19: #{tpu_custom_call.1} parent=11 // pred_region
          _
        $region20: #{tpu_custom_call.1} parent=11 // pred_fallthru
          _
        // Predicated region
        $region21: #{tpu_custom_call.1} parent=11 // pred_check
          %p262 = pneg %p110
        $region22: #{tpu_custom_call.1} parent=11 // pred_check_branch
          %264 = sbr.rel (%p262) target = $region24
        $region23: #{tpu_custom_call.1} parent=11 // pred_region
          _
        $region24: #{tpu_custom_call.1} parent=11 // pred_fallthru
          _
        // Predicated region
        $region25: #{tpu_custom_call.1} parent=11 // pred_check
          %p265 = pneg %p131
        $region26: #{tpu_custom_call.1} parent=11 // pred_check_branch
          %267 = sbr.rel (%p265) target = $region28
        $region27: #{tpu_custom_call.1} parent=11 // pred_region
          _
        $region28: #{tpu_custom_call.1} parent=11 // pred_fallthru
          _
        // Predicated region
        $region29: #{tpu_custom_call.1} parent=11 // pred_check
          %p268 = pneg %p152
        $region30: #{tpu_custom_call.1} parent=11 // pred_check_branch
          %270 = sbr.rel (%p268) target = $region32
        $region31: #{tpu_custom_call.1} parent=11 // pred_region
          _
        $region32: #{tpu_custom_call.1} parent=11 // pred_fallthru
          _
        // Predicated region
        $region33: #{tpu_custom_call.1} parent=11 // pred_check
          %p271 = pneg %p173
        $region34: #{tpu_custom_call.1} parent=11 // pred_check_branch
          %273 = sbr.rel (%p271) target = $region36
        $region35: #{tpu_custom_call.1} parent=11 // pred_region
          _
        $region36: #{tpu_custom_call.1} parent=11 // pred_fallthru
          _
        // Predicated region
        $region37: #{tpu_custom_call.1} parent=11 // pred_check
          %p274 = pneg %p194
        $region38: #{tpu_custom_call.1} parent=11 // pred_check_branch
          %276 = sbr.rel (%p274) target = $region40
        $region39: #{tpu_custom_call.1} parent=11 // pred_region
          _
        $region40: #{tpu_custom_call.1} parent=11 // pred_fallthru
          _
        // Predicated region
        $region41: #{tpu_custom_call.1} parent=11 // pred_check
          %p277 = pneg %p215
        $region42: #{tpu_custom_call.1} parent=11 // pred_check_branch
          %279 = sbr.rel (%p277) target = $region44
        $region43: #{tpu_custom_call.1} parent=11 // pred_region
          _
        $region44: #{tpu_custom_call.1} parent=11 // pred_fallthru
          _
      $region12: #{tpu_custom_call.1} parent=5 // pred_fallthru
        _
      %p280 = scmp.lt.s32.totalorder %s21, 2
      // Predicated region
      $region45: #{tpu_custom_call.1} parent=5 // pred_check
        %p281 = pneg %p280
      $region46: #{tpu_custom_call.1} parent=5 // pred_check_branch
        %283 = sbr.rel (%p281) target = $region48
      $region47: #{tpu_custom_call.1} parent=5 // pred_region
        // Predicated region
        $region49: #{tpu_custom_call.1} parent=47 // pred_check
          %p284 = pneg %p41
        $region50: #{tpu_custom_call.1} parent=47 // pred_check_branch
          %286 = sbr.rel (%p284) target = $region52
        $region51: #{tpu_custom_call.1} parent=47 // pred_region
          %s287 = sand.u32 %s31, 1
          %s288 = scalar_lea.sflag [#allocation3], %s287
          %s289 = sand.u32 %s31, 1
          %s290 = smul.addr %s289, 128
          %s291 = scalar_lea.vmem [#allocation2], %s290
          %s292 = smul.u32 8, %s21
          %294 = vsyncadd %s288, 0
          %s295 = smul.addr %s292, 2
          %s296 = smul.addr %s295, 8
          %s297 = scalar_lea.hbm %s0, %s296
          %s298 = sshll.u32 %s297, 4
          %s299 = int_to_ptr.hbm [resolvable:$true] %s298
          %s300 = sshll.u32 %s291, 4
          %s301 = int_to_ptr.vmem [resolvable:$true] %s300
          %306 = dma.hbm_to_vmem [thread:$0]  %s299, 2048, %s301, %s288, 128, 128, 8
        $region52: #{tpu_custom_call.1} parent=47 // pred_fallthru
          _
      $region48: #{tpu_custom_call.1} parent=5 // pred_fallthru
        _
      %p307 = scmp.le.s32.totalorder 1, %s21
      %p308 = scmp.lt.s32.totalorder %s21, 3
      %p309 = pnand %p307, %p308
      %p310 = pneg %p309
      // Predicated region
      $region53: #{tpu_custom_call.1} parent=5 // pred_check
        _
      $region54: #{tpu_custom_call.1} parent=5 // pred_check_branch
        %312 = sbr.rel (%p309) target = $region56
      $region55: #{tpu_custom_call.1} parent=5 // pred_region
        %s313 = ssub.s32 %s21, 1
        %s314 = sand.u32 %s34, 1
        %s315 = scalar_lea.sflag [#allocation3], %s314
        %s316 = sand.u32 %s34, 1
        %s317 = smul.addr %s316, 128
        %s318 = scalar_lea.vmem [#allocation2], %s317
        // Predicated region
        $region57: #{tpu_custom_call.1} parent=55 // pred_check
          %p319 = pneg %p47
        $region58: #{tpu_custom_call.1} parent=55 // pred_check_branch
          %321 = sbr.rel (%p319) target = $region60
        $region59: #{tpu_custom_call.1} parent=55 // pred_region
          %323 = dma.done %s315, 2048
        $region60: #{tpu_custom_call.1} parent=55 // pred_fallthru
          _
        %s324 = sand.u32 %s34, 1
        %s325 = scalar_lea.sflag [#allocation3], %s324
        %s326 = sand.u32 %s34, 1
        %s327 = smul.addr %s326, 128
        %s328 = scalar_lea.vmem [#allocation2], %s327
        %p329 = pneg %p47
        %p330 = pneg %p44
        %p331 = pneg %p68
        %p332 = pneg %p65
        %p333 = pneg %p89
        %p334 = pneg %p86
        %p335 = pneg %p110
        %p336 = pneg %p107
        %p337 = pneg %p131
        %p338 = pneg %p128
        %p339 = pneg %p152
        %p340 = pneg %p149
        %p341 = pneg %p173
        %p342 = pneg %p170
        %p343 = pneg %p194
        %p344 = pneg %p191
        %p345 = pneg %p215
        %p346 = pneg %p212
        %p347 = pneg %p241
        %p348 = pneg %p238
        %s349 = sand.u32 %s228, 1
        %s350 = scalar_lea.sflag [#allocation4], %s349
        %s351 = sand.u32 %s228, 1
        %s352 = smul.addr %s351, 8
        %s353 = scalar_lea.vmem [#allocation5], %s352
        %s354 = smul.u32 8, %s26
        %v355 = vld [vmem:[%s318] sm:$0xff]
        %v356 = vld [vmem:[%s318 + $0x8] sm:$0xff]
        %v357 = vld [vmem:[%s318 + $0x10] sm:$0xff]
        %v358 = vld [vmem:[%s318 + $0x18] sm:$0xff]
        %v359 = vld [vmem:[%s318 + $0x20] sm:$0xff]
        %v360 = vld [vmem:[%s318 + $0x28] sm:$0xff]
        %v361 = vld [vmem:[%s318 + $0x30] sm:$0xff]
        %v362 = vld [vmem:[%s318 + $0x38] sm:$0xff]
        %v363 = vld [vmem:[%s318 + $0x40] sm:$0xff]
        %v364 = vld [vmem:[%s318 + $0x48] sm:$0xff]
        %v365 = vld [vmem:[%s318 + $0x50] sm:$0xff]
        %v366 = vld [vmem:[%s318 + $0x58] sm:$0xff]
        %v367 = vld [vmem:[%s318 + $0x60] sm:$0xff]
        %v368 = vld [vmem:[%s318 + $0x68] sm:$0xff]
        %v369 = vld [vmem:[%s318 + $0x70] sm:$0xff]
        %v370 = vld [vmem:[%s318 + $0x78] sm:$0xff]
        %v371 = vld [vmem:[%s1] sm:$0xff]
        %v372 = vld [vmem:[%s1 + $0x8] sm:$0xff]
        %v373 = vld [vmem:[%s1 + $0x10] sm:$0xff]
        %v374 = vld [vmem:[%s1 + $0x18] sm:$0xff]
        %v375 = vld [vmem:[%s1 + $0x20] sm:$0xff]
        %v376 = vld [vmem:[%s1 + $0x28] sm:$0xff]
        %v377 = vld [vmem:[%s1 + $0x30] sm:$0xff]
        %v378 = vld [vmem:[%s1 + $0x38] sm:$0xff]
        %v379 = vld [vmem:[%s2] sm:$0x1]
        %vm382 = vcmask 1046528
        %v383 = vrot.slane %v355, 1
        %v384 = vrot.slane %v356, 1
        %v385 = vsel %vm382, %v383, %v384
        %386 = vrot.lane.b32.xlu0 %v385, 32
        %v387 = vpop.permute.xlu0 %386
        %388 = vrot.lane.b32.xlu0 %v384, 32
        %v389 = vpop.permute.xlu0 %388
        %vm392 = vcmask 261120
        %v393 = vsel %vm392, %v355, %v387
        %v394 = vsel %vm392, %v356, %v389
        %v396 = vperm.slane %v379, 0
        %vm398 = vcmask 523264
        %v400 = vsel %vm398, %v393, 0
        %v403 = vsel %vm398, %v394, 0
        %405 = vmatpush.msra.mxu0 0.0
        %406 = vmatpush.msra.mxu0 0.0
        %407 = vmatpush.msra.mxu0 0.0
        %408 = vmatpush.msra.mxu0 0.0
        %409 = vmatpush.msra.mxu0 0.0
        %410 = vmatpush.msra.mxu0 0.0
        %411 = vmatpush.msra.mxu0 0.0
        %412 = vmatpush.msra.mxu0 0.0
        %413 = vmatpush.msra.mxu0 %v378
        %414 = vmatpush.msra.mxu0 %v377
        %415 = vmatpush.msra.mxu0 %v376
        %416 = vmatpush.msra.mxu0 %v375
        %417 = vmatpush.msra.mxu0 %v374
        %418 = vmatpush.msra.mxu0 %v373
        %419 = vmatpush.msra.mxu0 %v372
        %420 = vmatpush.msra.mxu0 %v371
        %421 = vmatmul.f32.gmra.mxu0 %v400
        %v422 = vpop.f32.mrf.mxu0
        %v423 = vadd.f32 %v396, %v422
        %424 = vmatmul.f32.gmra.mxu0 %v403
        %v425 = vpop.f32.mrf.mxu0
        %v426 = vadd.f32 %v396, %v425
        %427 = vdwg.mxu0
        %v428 = vmax.f32 %v423, 0.0
        %v429 = vmax.f32 %v426, 0.0
        %vm430 = vcmask 124928
        %v431 = vsel %vm430, %v428, -inf
        %v432 = vrot.slane %v431, 4
        %v433 = vmax.f32 %v431, %v432
        %v434 = vrot.slane %v433, 2
        %v435 = vmax.f32 %v433, %v434
        %v436 = vrot.slane %v435, 1
        %v437 = vmax.f32 %v435, %v436
        %vm438 = vcmask 128003
        %v439 = vsel %vm438, %v428, -inf
        %v440 = vrot.slane %v439, 4
        %v441 = vmax.f32 %v439, %v440
        %v442 = vrot.slane %v441, 2
        %v443 = vmax.f32 %v441, %v442
        %v444 = vrot.slane %v443, 1
        %v445 = vmax.f32 %v443, %v444
        %vm446 = vcmask 130054
        %v447 = vsel %vm446, %v428, -inf
        %vm448 = vcmask 122880
        %v449 = vsel %vm448, %v429, -inf
        %v450 = vmax.f32 %v447, %v449
        %v451 = vrot.slane %v450, 4
        %v452 = vmax.f32 %v450, %v451
        %v453 = vrot.slane %v452, 2
        %v454 = vmax.f32 %v452, %v453
        %v455 = vrot.slane %v454, 1
        %v456 = vmax.f32 %v454, %v455
        %vm457 = vcmask 125953
        %v458 = vsel %vm457, %v429, -inf
        %v459 = vrot.slane %v458, 4
        %v460 = vmax.f32 %v458, %v459
        %v461 = vrot.slane %v460, 2
        %v462 = vmax.f32 %v460, %v461
        %v463 = vrot.slane %v462, 1
        %v464 = vmax.f32 %v462, %v463
        %vm465 = vcmask 129025
        %v466 = vsel %vm465, %v429, -inf
        %v467 = vrot.slane %v466, 4
        %v468 = vmax.f32 %v466, %v467
        %v469 = vrot.slane %v468, 2
        %v470 = vmax.f32 %v468, %v469
        %v471 = vrot.slane %v470, 1
        %v472 = vmax.f32 %v470, %v471
        %474 = vrot.lane.b32.xlu0 %v445, 16
        %v475 = vpop.permute.xlu0 %474
        %478 = vrot.lane.b32.xlu0 %v456, 32
        %v479 = vpop.permute.xlu0 %478
        %482 = vrot.lane.b32.xlu0 %v464, 48
        %v483 = vpop.permute.xlu0 %482
        %486 = vrot.lane.b32.xlu0 %v472, 64
        %v487 = vpop.permute.xlu0 %486
        %vm489 = vcmask 130048
        %v490 = vsel %vm489, %v437, %v475
        %v491 = vsel %vm392, %v490, %v479
        %vm492 = vcmask 392192
        %v493 = vsel %vm492, %v491, %v483
        %v494 = vsel %vm398, %v493, %v487
        %v497 = vrot.slane %v357, 1
        %v498 = vrot.slane %v358, 1
        %v499 = vsel %vm382, %v497, %v498
        %500 = vrot.lane.b32.xlu0 %v499, 32
        %v501 = vpop.permute.xlu0 %500
        %502 = vrot.lane.b32.xlu0 %v498, 32
        %v503 = vpop.permute.xlu0 %502
        %v506 = vsel %vm392, %v357, %v501
        %v507 = vsel %vm392, %v358, %v503
        %v509 = vsel %vm398, %v506, 0
        %v512 = vsel %vm398, %v507, 0
        %514 = vmatpush.msra.mxu0 0.0
        %515 = vmatpush.msra.mxu0 0.0
        %516 = vmatpush.msra.mxu0 0.0
        %517 = vmatpush.msra.mxu0 0.0
        %518 = vmatpush.msra.mxu0 0.0
        %519 = vmatpush.msra.mxu0 0.0
        %520 = vmatpush.msra.mxu0 0.0
        %521 = vmatpush.msra.mxu0 0.0
        %522 = vmatpush.msra.mxu0 %v378
        %523 = vmatpush.msra.mxu0 %v377
        %524 = vmatpush.msra.mxu0 %v376
        %525 = vmatpush.msra.mxu0 %v375
        %526 = vmatpush.msra.mxu0 %v374
        %527 = vmatpush.msra.mxu0 %v373
        %528 = vmatpush.msra.mxu0 %v372
        %529 = vmatpush.msra.mxu0 %v371
        %530 = vmatmul.f32.gmra.mxu0 %v509
        %v531 = vpop.f32.mrf.mxu0
        %v532 = vadd.f32 %v396, %v531
        %533 = vmatmul.f32.gmra.mxu0 %v512
        %v534 = vpop.f32.mrf.mxu0
        %v535 = vadd.f32 %v396, %v534
        %536 = vdwg.mxu0
        %v537 = vmax.f32 %v532, 0.0
        %v538 = vmax.f32 %v535, 0.0
        %v539 = vsel %vm430, %v537, -inf
        %v540 = vrot.slane %v539, 4
        %v541 = vmax.f32 %v539, %v540
        %v542 = vrot.slane %v541, 2
        %v543 = vmax.f32 %v541, %v542
        %v544 = vrot.slane %v543, 1
        %v545 = vmax.f32 %v543, %v544
        %v546 = vsel %vm438, %v537, -inf
        %v547 = vrot.slane %v546, 4
        %v548 = vmax.f32 %v546, %v547
        %v549 = vrot.slane %v548, 2
        %v550 = vmax.f32 %v548, %v549
        %v551 = vrot.slane %v550, 1
        %v552 = vmax.f32 %v550, %v551
        %v553 = vsel %vm446, %v537, -inf
        %v554 = vsel %vm448, %v538, -inf
        %v555 = vmax.f32 %v553, %v554
        %v556 = vrot.slane %v555, 4
        %v557 = vmax.f32 %v555, %v556
        %v558 = vrot.slane %v557, 2
        %v559 = vmax.f32 %v557, %v558
        %v560 = vrot.slane %v559, 1
        %v561 = vmax.f32 %v559, %v560
        %v562 = vsel %vm457, %v538, -inf
        %v563 = vrot.slane %v562, 4
        %v564 = vmax.f32 %v562, %v563
        %v565 = vrot.slane %v564, 2
        %v566 = vmax.f32 %v564, %v565
        %v567 = vrot.slane %v566, 1
        %v568 = vmax.f32 %v566, %v567
        %v569 = vsel %vm465, %v538, -inf
        %v570 = vrot.slane %v569, 4
        %v571 = vmax.f32 %v569, %v570
        %v572 = vrot.slane %v571, 2
        %v573 = vmax.f32 %v571, %v572
        %v574 = vrot.slane %v573, 1
        %v575 = vmax.f32 %v573, %v574
        %577 = vrot.lane.b32.xlu0 %v552, 16
        %v578 = vpop.permute.xlu0 %577
        %581 = vrot.lane.b32.xlu0 %v561, 32
        %v582 = vpop.permute.xlu0 %581
        %585 = vrot.lane.b32.xlu0 %v568, 48
        %v586 = vpop.permute.xlu0 %585
        %589 = vrot.lane.b32.xlu0 %v575, 64
        %v590 = vpop.permute.xlu0 %589
        %v592 = vsel %vm489, %v545, %v578
        %v593 = vsel %vm392, %v592, %v582
        %v594 = vsel %vm492, %v593, %v586
        %v595 = vsel %vm398, %v594, %v590
        %v598 = vrot.slane %v359, 1
        %v599 = vrot.slane %v360, 1
        %v600 = vsel %vm382, %v598, %v599
        %601 = vrot.lane.b32.xlu0 %v600, 32
        %v602 = vpop.permute.xlu0 %601
        %603 = vrot.lane.b32.xlu0 %v599, 32
        %v604 = vpop.permute.xlu0 %603
        %v607 = vsel %vm392, %v359, %v602
        %v608 = vsel %vm392, %v360, %v604
        %v610 = vsel %vm398, %v607, 0
        %v613 = vsel %vm398, %v608, 0
        %615 = vmatpush.msra.mxu0 0.0
        %616 = vmatpush.msra.mxu0 0.0
        %617 = vmatpush.msra.mxu0 0.0
        %618 = vmatpush.msra.mxu0 0.0
        %619 = vmatpush.msra.mxu0 0.0
        %620 = vmatpush.msra.mxu0 0.0
        %621 = vmatpush.msra.mxu0 0.0
        %622 = vmatpush.msra.mxu0 0.0
        %623 = vmatpush.msra.mxu0 %v378
        %624 = vmatpush.msra.mxu0 %v377
        %625 = vmatpush.msra.mxu0 %v376
        %626 = vmatpush.msra.mxu0 %v375
        %627 = vmatpush.msra.mxu0 %v374
        %628 = vmatpush.msra.mxu0 %v373
        %629 = vmatpush.msra.mxu0 %v372
        %630 = vmatpush.msra.mxu0 %v371
        %631 = vmatmul.f32.gmra.mxu0 %v610
        %v632 = vpop.f32.mrf.mxu0
        %v633 = vadd.f32 %v396, %v632
        %634 = vmatmul.f32.gmra.mxu0 %v613
        %v635 = vpop.f32.mrf.mxu0
        %v636 = vadd.f32 %v396, %v635
        %637 = vdwg.mxu0
        %v638 = vmax.f32 %v633, 0.0
        %v639 = vmax.f32 %v636, 0.0
        %v640 = vsel %vm430, %v638, -inf
        %v641 = vrot.slane %v640, 4
        %v642 = vmax.f32 %v640, %v641
        %v643 = vrot.slane %v642, 2
        %v644 = vmax.f32 %v642, %v643
        %v645 = vrot.slane %v644, 1
        %v646 = vmax.f32 %v644, %v645
        %v647 = vsel %vm438, %v638, -inf
        %v648 = vrot.slane %v647, 4
        %v649 = vmax.f32 %v647, %v648
        %v650 = vrot.slane %v649, 2
        %v651 = vmax.f32 %v649, %v650
        %v652 = vrot.slane %v651, 1
        %v653 = vmax.f32 %v651, %v652
        %v654 = vsel %vm446, %v638, -inf
        %v655 = vsel %vm448, %v639, -inf
        %v656 = vmax.f32 %v654, %v655
        %v657 = vrot.slane %v656, 4
        %v658 = vmax.f32 %v656, %v657
        %v659 = vrot.slane %v658, 2
        %v660 = vmax.f32 %v658, %v659
        %v661 = vrot.slane %v660, 1
        %v662 = vmax.f32 %v660, %v661
        %v663 = vsel %vm457, %v639, -inf
        %v664 = vrot.slane %v663, 4
        %v665 = vmax.f32 %v663, %v664
        %v666 = vrot.slane %v665, 2
        %v667 = vmax.f32 %v665, %v666
        %v668 = vrot.slane %v667, 1
        %v669 = vmax.f32 %v667, %v668
        %v670 = vsel %vm465, %v639, -inf
        %v671 = vrot.slane %v670, 4
        %v672 = vmax.f32 %v670, %v671
        %v673 = vrot.slane %v672, 2
        %v674 = vmax.f32 %v672, %v673
        %v675 = vrot.slane %v674, 1
        %v676 = vmax.f32 %v674, %v675
        %678 = vrot.lane.b32.xlu0 %v653, 16
        %v679 = vpop.permute.xlu0 %678
        %682 = vrot.lane.b32.xlu0 %v662, 32
        %v683 = vpop.permute.xlu0 %682
        %686 = vrot.lane.b32.xlu0 %v669, 48
        %v687 = vpop.permute.xlu0 %686
        %690 = vrot.lane.b32.xlu0 %v676, 64
        %v691 = vpop.permute.xlu0 %690
        %v693 = vsel %vm489, %v646, %v679
        %v694 = vsel %vm392, %v693, %v683
        %v695 = vsel %vm492, %v694, %v687
        %v696 = vsel %vm398, %v695, %v691
        %v699 = vrot.slane %v361, 1
        %v700 = vrot.slane %v362, 1
        %v701 = vsel %vm382, %v699, %v700
        %702 = vrot.lane.b32.xlu0 %v701, 32
        %v703 = vpop.permute.xlu0 %702
        %704 = vrot.lane.b32.xlu0 %v700, 32
        %v705 = vpop.permute.xlu0 %704
        %v708 = vsel %vm392, %v361, %v703
        %v709 = vsel %vm392, %v362, %v705
        %v711 = vsel %vm398, %v708, 0
        %v714 = vsel %vm398, %v709, 0
        %716 = vmatpush.msra.mxu0 0.0
        %717 = vmatpush.msra.mxu0 0.0
        %718 = vmatpush.msra.mxu0 0.0
        %719 = vmatpush.msra.mxu0 0.0
        %720 = vmatpush.msra.mxu0 0.0
        %721 = vmatpush.msra.mxu0 0.0
        %722 = vmatpush.msra.mxu0 0.0
        %723 = vmatpush.msra.mxu0 0.0
        %724 = vmatpush.msra.mxu0 %v378
        %725 = vmatpush.msra.mxu0 %v377
        %726 = vmatpush.msra.mxu0 %v376
        %727 = vmatpush.msra.mxu0 %v375
        %728 = vmatpush.msra.mxu0 %v374
        %729 = vmatpush.msra.mxu0 %v373
        %730 = vmatpush.msra.mxu0 %v372
        %731 = vmatpush.msra.mxu0 %v371
        %732 = vmatmul.f32.gmra.mxu0 %v711
        %v733 = vpop.f32.mrf.mxu0
        %v734 = vadd.f32 %v396, %v733
        %735 = vmatmul.f32.gmra.mxu0 %v714
        %v736 = vpop.f32.mrf.mxu0
        %v737 = vadd.f32 %v396, %v736
        %738 = vdwg.mxu0
        %v739 = vmax.f32 %v734, 0.0
        %v740 = vmax.f32 %v737, 0.0
        %v741 = vsel %vm430, %v739, -inf
        %v742 = vrot.slane %v741, 4
        %v743 = vmax.f32 %v741, %v742
        %v744 = vrot.slane %v743, 2
        %v745 = vmax.f32 %v743, %v744
        %v746 = vrot.slane %v745, 1
        %v747 = vmax.f32 %v745, %v746
        %v748 = vsel %vm438, %v739, -inf
        %v749 = vrot.slane %v748, 4
        %v750 = vmax.f32 %v748, %v749
        %v751 = vrot.slane %v750, 2
        %v752 = vmax.f32 %v750, %v751
        %v753 = vrot.slane %v752, 1
        %v754 = vmax.f32 %v752, %v753
        %v755 = vsel %vm446, %v739, -inf
        %v756 = vsel %vm448, %v740, -inf
        %v757 = vmax.f32 %v755, %v756
        %v758 = vrot.slane %v757, 4
        %v759 = vmax.f32 %v757, %v758
        %v760 = vrot.slane %v759, 2
        %v761 = vmax.f32 %v759, %v760
        %v762 = vrot.slane %v761, 1
        %v763 = vmax.f32 %v761, %v762
        %v764 = vsel %vm457, %v740, -inf
        %v765 = vrot.slane %v764, 4
        %v766 = vmax.f32 %v764, %v765
        %v767 = vrot.slane %v766, 2
        %v768 = vmax.f32 %v766, %v767
        %v769 = vrot.slane %v768, 1
        %v770 = vmax.f32 %v768, %v769
        %v771 = vsel %vm465, %v740, -inf
        %v772 = vrot.slane %v771, 4
        %v773 = vmax.f32 %v771, %v772
        %v774 = vrot.slane %v773, 2
        %v775 = vmax.f32 %v773, %v774
        %v776 = vrot.slane %v775, 1
        %v777 = vmax.f32 %v775, %v776
        %779 = vrot.lane.b32.xlu0 %v754, 16
        %v780 = vpop.permute.xlu0 %779
        %783 = vrot.lane.b32.xlu0 %v763, 32
        %v784 = vpop.permute.xlu0 %783
        %787 = vrot.lane.b32.xlu0 %v770, 48
        %v788 = vpop.permute.xlu0 %787
        %791 = vrot.lane.b32.xlu0 %v777, 64
        %v792 = vpop.permute.xlu0 %791
        %v794 = vsel %vm489, %v747, %v780
        %v795 = vsel %vm392, %v794, %v784
        %v796 = vsel %vm492, %v795, %v788
        %v797 = vsel %vm398, %v796, %v792
        %v800 = vrot.slane %v363, 1
        %v801 = vrot.slane %v364, 1
        %v802 = vsel %vm382, %v800, %v801
        %803 = vrot.lane.b32.xlu0 %v802, 32
        %v804 = vpop.permute.xlu0 %803
        %805 = vrot.lane.b32.xlu0 %v801, 32
        %v806 = vpop.permute.xlu0 %805
        %v809 = vsel %vm392, %v363, %v804
        %v810 = vsel %vm392, %v364, %v806
        %v812 = vsel %vm398, %v809, 0
        %v815 = vsel %vm398, %v810, 0
        %817 = vmatpush.msra.mxu0 0.0
        %818 = vmatpush.msra.mxu0 0.0
        %819 = vmatpush.msra.mxu0 0.0
        %820 = vmatpush.msra.mxu0 0.0
        %821 = vmatpush.msra.mxu0 0.0
        %822 = vmatpush.msra.mxu0 0.0
        %823 = vmatpush.msra.mxu0 0.0
        %824 = vmatpush.msra.mxu0 0.0
        %825 = vmatpush.msra.mxu0 %v378
        %826 = vmatpush.msra.mxu0 %v377
        %827 = vmatpush.msra.mxu0 %v376
        %828 = vmatpush.msra.mxu0 %v375
        %829 = vmatpush.msra.mxu0 %v374
        %830 = vmatpush.msra.mxu0 %v373
        %831 = vmatpush.msra.mxu0 %v372
        %832 = vmatpush.msra.mxu0 %v371
        %833 = vmatmul.f32.gmra.mxu0 %v812
        %v834 = vpop.f32.mrf.mxu0
        %v835 = vadd.f32 %v396, %v834
        %836 = vmatmul.f32.gmra.mxu0 %v815
        %v837 = vpop.f32.mrf.mxu0
        %v838 = vadd.f32 %v396, %v837
        %839 = vdwg.mxu0
        %v840 = vmax.f32 %v835, 0.0
        %v841 = vmax.f32 %v838, 0.0
        %v842 = vsel %vm430, %v840, -inf
        %v843 = vrot.slane %v842, 4
        %v844 = vmax.f32 %v842, %v843
        %v845 = vrot.slane %v844, 2
        %v846 = vmax.f32 %v844, %v845
        %v847 = vrot.slane %v846, 1
        %v848 = vmax.f32 %v846, %v847
        %v849 = vsel %vm438, %v840, -inf
        %v850 = vrot.slane %v849, 4
        %v851 = vmax.f32 %v849, %v850
        %v852 = vrot.slane %v851, 2
        %v853 = vmax.f32 %v851, %v852
        %v854 = vrot.slane %v853, 1
        %v855 = vmax.f32 %v853, %v854
        %v856 = vsel %vm446, %v840, -inf
        %v857 = vsel %vm448, %v841, -inf
        %v858 = vmax.f32 %v856, %v857
        %v859 = vrot.slane %v858, 4
        %v860 = vmax.f32 %v858, %v859
        %v861 = vrot.slane %v860, 2
        %v862 = vmax.f32 %v860, %v861
        %v863 = vrot.slane %v862, 1
        %v864 = vmax.f32 %v862, %v863
        %v865 = vsel %vm457, %v841, -inf
        %v866 = vrot.slane %v865, 4
        %v867 = vmax.f32 %v865, %v866
        %v868 = vrot.slane %v867, 2
        %v869 = vmax.f32 %v867, %v868
        %v870 = vrot.slane %v869, 1
        %v871 = vmax.f32 %v869, %v870
        %v872 = vsel %vm465, %v841, -inf
        %v873 = vrot.slane %v872, 4
        %v874 = vmax.f32 %v872, %v873
        %v875 = vrot.slane %v874, 2
        %v876 = vmax.f32 %v874, %v875
        %v877 = vrot.slane %v876, 1
        %v878 = vmax.f32 %v876, %v877
        %880 = vrot.lane.b32.xlu0 %v855, 16
        %v881 = vpop.permute.xlu0 %880
        %884 = vrot.lane.b32.xlu0 %v864, 32
        %v885 = vpop.permute.xlu0 %884
        %888 = vrot.lane.b32.xlu0 %v871, 48
        %v889 = vpop.permute.xlu0 %888
        %892 = vrot.lane.b32.xlu0 %v878, 64
        %v893 = vpop.permute.xlu0 %892
        %v895 = vsel %vm489, %v848, %v881
        %v896 = vsel %vm392, %v895, %v885
        %v897 = vsel %vm492, %v896, %v889
        %v898 = vsel %vm398, %v897, %v893
        %v901 = vrot.slane %v365, 1
        %v902 = vrot.slane %v366, 1
        %v903 = vsel %vm382, %v901, %v902
        %904 = vrot.lane.b32.xlu0 %v903, 32
        %v905 = vpop.permute.xlu0 %904
        %906 = vrot.lane.b32.xlu0 %v902, 32
        %v907 = vpop.permute.xlu0 %906
        %v910 = vsel %vm392, %v365, %v905
        %v911 = vsel %vm392, %v366, %v907
        %v913 = vsel %vm398, %v910, 0
        %v916 = vsel %vm398, %v911, 0
        %918 = vmatpush.msra.mxu0 0.0
        %919 = vmatpush.msra.mxu0 0.0
        %920 = vmatpush.msra.mxu0 0.0
        %921 = vmatpush.msra.mxu0 0.0
        %922 = vmatpush.msra.mxu0 0.0
        %923 = vmatpush.msra.mxu0 0.0
        %924 = vmatpush.msra.mxu0 0.0
        %925 = vmatpush.msra.mxu0 0.0
        %926 = vmatpush.msra.mxu0 %v378
        %927 = vmatpush.msra.mxu0 %v377
        %928 = vmatpush.msra.mxu0 %v376
        %929 = vmatpush.msra.mxu0 %v375
        %930 = vmatpush.msra.mxu0 %v374
        %931 = vmatpush.msra.mxu0 %v373
        %932 = vmatpush.msra.mxu0 %v372
        %933 = vmatpush.msra.mxu0 %v371
        %934 = vmatmul.f32.gmra.mxu0 %v913
        %v935 = vpop.f32.mrf.mxu0
        %v936 = vadd.f32 %v396, %v935
        %937 = vmatmul.f32.gmra.mxu0 %v916
        %v938 = vpop.f32.mrf.mxu0
        %v939 = vadd.f32 %v396, %v938
        %940 = vdwg.mxu0
        %v941 = vmax.f32 %v936, 0.0
        %v942 = vmax.f32 %v939, 0.0
        %v943 = vsel %vm430, %v941, -inf
        %v944 = vrot.slane %v943, 4
        %v945 = vmax.f32 %v943, %v944
        %v946 = vrot.slane %v945, 2
        %v947 = vmax.f32 %v945, %v946
        %v948 = vrot.slane %v947, 1
        %v949 = vmax.f32 %v947, %v948
        %v950 = vsel %vm438, %v941, -inf
        %v951 = vrot.slane %v950, 4
        %v952 = vmax.f32 %v950, %v951
        %v953 = vrot.slane %v952, 2
        %v954 = vmax.f32 %v952, %v953
        %v955 = vrot.slane %v954, 1
        %v956 = vmax.f32 %v954, %v955
        %v957 = vsel %vm446, %v941, -inf
        %v958 = vsel %vm448, %v942, -inf
        %v959 = vmax.f32 %v957, %v958
        %v960 = vrot.slane %v959, 4
        %v961 = vmax.f32 %v959, %v960
        %v962 = vrot.slane %v961, 2
        %v963 = vmax.f32 %v961, %v962
        %v964 = vrot.slane %v963, 1
        %v965 = vmax.f32 %v963, %v964
        %v966 = vsel %vm457, %v942, -inf
        %v967 = vrot.slane %v966, 4
        %v968 = vmax.f32 %v966, %v967
        %v969 = vrot.slane %v968, 2
        %v970 = vmax.f32 %v968, %v969
        %v971 = vrot.slane %v970, 1
        %v972 = vmax.f32 %v970, %v971
        %v973 = vsel %vm465, %v942, -inf
        %v974 = vrot.slane %v973, 4
        %v975 = vmax.f32 %v973, %v974
        %v976 = vrot.slane %v975, 2
        %v977 = vmax.f32 %v975, %v976
        %v978 = vrot.slane %v977, 1
        %v979 = vmax.f32 %v977, %v978
        %981 = vrot.lane.b32.xlu0 %v956, 16
        %v982 = vpop.permute.xlu0 %981
        %985 = vrot.lane.b32.xlu0 %v965, 32
        %v986 = vpop.permute.xlu0 %985
        %989 = vrot.lane.b32.xlu0 %v972, 48
        %v990 = vpop.permute.xlu0 %989
        %993 = vrot.lane.b32.xlu0 %v979, 64
        %v994 = vpop.permute.xlu0 %993
        %v996 = vsel %vm489, %v949, %v982
        %v997 = vsel %vm392, %v996, %v986
        %v998 = vsel %vm492, %v997, %v990
        %v999 = vsel %vm398, %v998, %v994
        %v1002 = vrot.slane %v367, 1
        %v1003 = vrot.slane %v368, 1
        %v1004 = vsel %vm382, %v1002, %v1003
        %1005 = vrot.lane.b32.xlu0 %v1004, 32
        %v1006 = vpop.permute.xlu0 %1005
        %1007 = vrot.lane.b32.xlu0 %v1003, 32
        %v1008 = vpop.permute.xlu0 %1007
        %v1011 = vsel %vm392, %v367, %v1006
        %v1012 = vsel %vm392, %v368, %v1008
        %v1014 = vsel %vm398, %v1011, 0
        %v1017 = vsel %vm398, %v1012, 0
        %1019 = vmatpush.msra.mxu0 0.0
        %1020 = vmatpush.msra.mxu0 0.0
        %1021 = vmatpush.msra.mxu0 0.0
        %1022 = vmatpush.msra.mxu0 0.0
        %1023 = vmatpush.msra.mxu0 0.0
        %1024 = vmatpush.msra.mxu0 0.0
        %1025 = vmatpush.msra.mxu0 0.0
        %1026 = vmatpush.msra.mxu0 0.0
        %1027 = vmatpush.msra.mxu0 %v378
        %1028 = vmatpush.msra.mxu0 %v377
        %1029 = vmatpush.msra.mxu0 %v376
        %1030 = vmatpush.msra.mxu0 %v375
        %1031 = vmatpush.msra.mxu0 %v374
        %1032 = vmatpush.msra.mxu0 %v373
        %1033 = vmatpush.msra.mxu0 %v372
        %1034 = vmatpush.msra.mxu0 %v371
        %1035 = vmatmul.f32.gmra.mxu0 %v1014
        %v1036 = vpop.f32.mrf.mxu0
        %v1037 = vadd.f32 %v396, %v1036
        %1038 = vmatmul.f32.gmra.mxu0 %v1017
        %v1039 = vpop.f32.mrf.mxu0
        %v1040 = vadd.f32 %v396, %v1039
        %1041 = vdwg.mxu0
        %v1042 = vmax.f32 %v1037, 0.0
        %v1043 = vmax.f32 %v1040, 0.0
        %v1044 = vsel %vm430, %v1042, -inf
        %v1045 = vrot.slane %v1044, 4
        %v1046 = vmax.f32 %v1044, %v1045
        %v1047 = vrot.slane %v1046, 2
        %v1048 = vmax.f32 %v1046, %v1047
        %v1049 = vrot.slane %v1048, 1
        %v1050 = vmax.f32 %v1048, %v1049
        %v1051 = vsel %vm438, %v1042, -inf
        %v1052 = vrot.slane %v1051, 4
        %v1053 = vmax.f32 %v1051, %v1052
        %v1054 = vrot.slane %v1053, 2
        %v1055 = vmax.f32 %v1053, %v1054
        %v1056 = vrot.slane %v1055, 1
        %v1057 = vmax.f32 %v1055, %v1056
        %v1058 = vsel %vm446, %v1042, -inf
        %v1059 = vsel %vm448, %v1043, -inf
        %v1060 = vmax.f32 %v1058, %v1059
        %v1061 = vrot.slane %v1060, 4
        %v1062 = vmax.f32 %v1060, %v1061
        %v1063 = vrot.slane %v1062, 2
        %v1064 = vmax.f32 %v1062, %v1063
        %v1065 = vrot.slane %v1064, 1
        %v1066 = vmax.f32 %v1064, %v1065
        %v1067 = vsel %vm457, %v1043, -inf
        %v1068 = vrot.slane %v1067, 4
        %v1069 = vmax.f32 %v1067, %v1068
        %v1070 = vrot.slane %v1069, 2
        %v1071 = vmax.f32 %v1069, %v1070
        %v1072 = vrot.slane %v1071, 1
        %v1073 = vmax.f32 %v1071, %v1072
        %v1074 = vsel %vm465, %v1043, -inf
        %v1075 = vrot.slane %v1074, 4
        %v1076 = vmax.f32 %v1074, %v1075
        %v1077 = vrot.slane %v1076, 2
        %v1078 = vmax.f32 %v1076, %v1077
        %v1079 = vrot.slane %v1078, 1
        %v1080 = vmax.f32 %v1078, %v1079
        %1082 = vrot.lane.b32.xlu0 %v1057, 16
        %v1083 = vpop.permute.xlu0 %1082
        %1086 = vrot.lane.b32.xlu0 %v1066, 32
        %v1087 = vpop.permute.xlu0 %1086
        %1090 = vrot.lane.b32.xlu0 %v1073, 48
        %v1091 = vpop.permute.xlu0 %1090
        %1094 = vrot.lane.b32.xlu0 %v1080, 64
        %v1095 = vpop.permute.xlu0 %1094
        %v1097 = vsel %vm489, %v1050, %v1083
        %v1098 = vsel %vm392, %v1097, %v1087
        %v1099 = vsel %vm492, %v1098, %v1091
        %v1100 = vsel %vm398, %v1099, %v1095
        %v1103 = vrot.slane %v369, 1
        %v1104 = vrot.slane %v370, 1
        %v1105 = vsel %vm382, %v1103, %v1104
        %1106 = vrot.lane.b32.xlu0 %v1105, 32
        %v1107 = vpop.permute.xlu0 %1106
        %1108 = vrot.lane.b32.xlu0 %v1104, 32
        %v1109 = vpop.permute.xlu0 %1108
        %v1112 = vsel %vm392, %v369, %v1107
        %v1113 = vsel %vm392, %v370, %v1109
        %v1115 = vsel %vm398, %v1112, 0
        %v1118 = vsel %vm398, %v1113, 0
        %1120 = vmatpush.msra.mxu0 0.0
        %1121 = vmatpush.msra.mxu0 0.0
        %1122 = vmatpush.msra.mxu0 0.0
        %1123 = vmatpush.msra.mxu0 0.0
        %1124 = vmatpush.msra.mxu0 0.0
        %1125 = vmatpush.msra.mxu0 0.0
        %1126 = vmatpush.msra.mxu0 0.0
        %1127 = vmatpush.msra.mxu0 0.0
        %1128 = vmatpush.msra.mxu0 %v378
        %1129 = vmatpush.msra.mxu0 %v377
        %1130 = vmatpush.msra.mxu0 %v376
        %1131 = vmatpush.msra.mxu0 %v375
        %1132 = vmatpush.msra.mxu0 %v374
        %1133 = vmatpush.msra.mxu0 %v373
        %1134 = vmatpush.msra.mxu0 %v372
        %1135 = vmatpush.msra.mxu0 %v371
        %1136 = vmatmul.f32.gmra.mxu0 %v1115
        %v1137 = vpop.f32.mrf.mxu0
        %v1138 = vadd.f32 %v396, %v1137
        %1139 = vmatmul.f32.gmra.mxu0 %v1118
        %v1140 = vpop.f32.mrf.mxu0
        %v1141 = vadd.f32 %v396, %v1140
        %1142 = vdwg.mxu0
        %v1143 = vmax.f32 %v1138, 0.0
        %v1144 = vmax.f32 %v1141, 0.0
        %v1145 = vsel %vm430, %v1143, -inf
        %v1146 = vrot.slane %v1145, 4
        %v1147 = vmax.f32 %v1145, %v1146
        %v1148 = vrot.slane %v1147, 2
        %v1149 = vmax.f32 %v1147, %v1148
        %v1150 = vrot.slane %v1149, 1
        %v1151 = vmax.f32 %v1149, %v1150
        %v1152 = vsel %vm438, %v1143, -inf
        %v1153 = vrot.slane %v1152, 4
        %v1154 = vmax.f32 %v1152, %v1153
        %v1155 = vrot.slane %v1154, 2
        %v1156 = vmax.f32 %v1154, %v1155
        %v1157 = vrot.slane %v1156, 1
        %v1158 = vmax.f32 %v1156, %v1157
        %v1159 = vsel %vm446, %v1143, -inf
        %v1160 = vsel %vm448, %v1144, -inf
        %v1161 = vmax.f32 %v1159, %v1160
        %v1162 = vrot.slane %v1161, 4
        %v1163 = vmax.f32 %v1161, %v1162
        %v1164 = vrot.slane %v1163, 2
        %v1165 = vmax.f32 %v1163, %v1164
        %v1166 = vrot.slane %v1165, 1
        %v1167 = vmax.f32 %v1165, %v1166
        %v1168 = vsel %vm457, %v1144, -inf
        %v1169 = vrot.slane %v1168, 4
        %v1170 = vmax.f32 %v1168, %v1169
        %v1171 = vrot.slane %v1170, 2
        %v1172 = vmax.f32 %v1170, %v1171
        %v1173 = vrot.slane %v1172, 1
        %v1174 = vmax.f32 %v1172, %v1173
        %v1175 = vsel %vm465, %v1144, -inf
        %v1176 = vrot.slane %v1175, 4
        %v1177 = vmax.f32 %v1175, %v1176
        %v1178 = vrot.slane %v1177, 2
        %v1179 = vmax.f32 %v1177, %v1178
        %v1180 = vrot.slane %v1179, 1
        %v1181 = vmax.f32 %v1179, %v1180
        %1183 = vrot.lane.b32.xlu0 %v1158, 16
        %v1184 = vpop.permute.xlu0 %1183
        %1187 = vrot.lane.b32.xlu0 %v1167, 32
        %v1188 = vpop.permute.xlu0 %1187
        %1191 = vrot.lane.b32.xlu0 %v1174, 48
        %v1192 = vpop.permute.xlu0 %1191
        %1195 = vrot.lane.b32.xlu0 %v1181, 64
        %v1196 = vpop.permute.xlu0 %1195
        %v1198 = vsel %vm489, %v1151, %v1184
        %v1199 = vsel %vm392, %v1198, %v1188
        %v1200 = vsel %vm492, %v1199, %v1192
        %v1201 = vsel %vm398, %v1200, %v1196
        %v1203 = vrot.slane %v595, 7
        %v1206 = vrot.slane %v696, 6
        %v1209 = vrot.slane %v797, 5
        %v1212 = vrot.slane %v898, 4
        %v1215 = vrot.slane %v999, 3
        %v1218 = vrot.slane %v1100, 2
        %v1221 = vrot.slane %v1201, 1
        %vm1223 = vcmask 1040384
        %v1224 = vsel %vm1223, %v494, %v1203
        %vm1225 = vcmask 1041408
        %v1226 = vsel %vm1225, %v1224, %v1206
        %vm1227 = vcmask 1042432
        %v1228 = vsel %vm1227, %v1226, %v1209
        %vm1229 = vcmask 1043456
        %v1230 = vsel %vm1229, %v1228, %v1212
        %vm1231 = vcmask 1044480
        %v1232 = vsel %vm1231, %v1230, %v1215
        %vm1233 = vcmask 1045504
        %v1234 = vsel %vm1233, %v1232, %v1218
        %v1235 = vsel %vm382, %v1234, %v1221
        %v1236 = vld [vmem:[%s3] sm:$0xff]
        %v1237 = vld [vmem:[%s3 + $0x8] sm:$0xff]
        %v1238 = vld [vmem:[%s3 + $0x10] sm:$0xff]
        %v1239 = vld [vmem:[%s3 + $0x18] sm:$0xff]
        %v1240 = vld [vmem:[%s3 + $0x20] sm:$0xff]
        %v1241 = vld [vmem:[%s3 + $0x28] sm:$0xff]
        %v1242 = vld [vmem:[%s3 + $0x30] sm:$0xff]
        %v1243 = vld [vmem:[%s3 + $0x38] sm:$0xff]
        %v1244 = vld [vmem:[%s3 + $0x40] sm:$0xff]
        %v1245 = vld [vmem:[%s3 + $0x48] sm:$0xff]
        %v1246 = vld [vmem:[%s4] sm:$0x1]
        %v1248 = vperm.slane %v1246, 0
        %vm1250 = vcmask 654336
        %v1252 = vsel %vm1250, %v1235, 0
        %1254 = vmatpush.msra.mxu0 0.0
        %1255 = vmatpush.msra.mxu0 0.0
        %1256 = vmatpush.msra.mxu0 0.0
        %1257 = vmatpush.msra.mxu0 0.0
        %1258 = vmatpush.msra.mxu0 0.0
        %1259 = vmatpush.msra.mxu0 0.0
        %1260 = vmatpush.msra.mxu0 %v1245
        %1261 = vmatpush.msra.mxu0 %v1244
        %1262 = vmatpush.msra.mxu0 %v1243
        %1263 = vmatpush.msra.mxu0 %v1242
        %1264 = vmatpush.msra.mxu0 %v1241
        %1265 = vmatpush.msra.mxu0 %v1240
        %1266 = vmatpush.msra.mxu0 %v1239
        %1267 = vmatpush.msra.mxu0 %v1238
        %1268 = vmatpush.msra.mxu0 %v1237
        %1269 = vmatpush.msra.mxu0 %v1236
        %1270 = vmatmul.f32.gmra.mxu0 %v1252
        %v1271 = vpop.f32.mrf.mxu0
        %v1272 = vadd.f32 %v1248, %v1271
        %1273 = vdwg.mxu0
        %v1274 = vxor.u32 %v1272, 2147483648
        %v1275 = vmul.f32 %v1274, 1.442695
        %v1276 = vpow.pop %v1275
        %v1277 = vadd.f32 %v1276, 1.0
        %v1278 = vrcp.pop %v1277
        %v1279 = vmul.f32 %v1277, %v1278
        %v1280 = vsub.f32 1.0, %v1279
        %v1281 = vmul.f32 %v1278, %v1280
        %v1282 = vadd.f32 %v1278, %v1281
        %vm1283 = vweird.f32 %v1277
        %vm1284 = vweird.f32 %v1278
        %vm1285 = vmor %vm1283, %vm1284
        %v1286 = vsel %vm1285, %v1278, %v1282
        %v1287 = vand.u32 2147483647, %v1277
        %vm1288 = vcmp.eq.f32.partialorder %v1287, 8.507059e+37
        %v1289 = vand.u32 %v1277, 2147483648
        %v1290 = vor.u32 1.1754944e-38, %v1289
        %v1291 = vsel %vm1288, %v1290, %v1286
        %v1292 = vmul.f32 1.0, %v1291
        %v1293 = vld [vmem:[%s5] sm:$0xff]
        %v1294 = vld [vmem:[%s5 + $0x8] sm:$0x3]
        %v1295 = vld [vmem:[%s6] sm:$0x1]
        %v1297 = vperm.slane %v1295, 0
        %vm1299 = vcmask 80896
        %v1301 = vsel %vm1299, %v1292, 0
        %v1304 = vsel %vm1225, %v1294, 0
        %1306 = vmatpush.msra.mxu0 0.0
        %1307 = vmatpush.msra.mxu0 0.0
        %1308 = vmatpush.msra.mxu0 0.0
        %1309 = vmatpush.msra.mxu0 0.0
        %1310 = vmatpush.msra.mxu0 0.0
        %1311 = vmatpush.msra.mxu0 0.0
        %1312 = vmatpush.msra.mxu0 0.0
        %1313 = vmatpush.msra.mxu0 0.0
        %1314 = vmatpush.msra.mxu0 0.0
        %1315 = vmatpush.msra.mxu0 0.0
        %1316 = vmatpush.msra.mxu0 0.0
        %1317 = vmatpush.msra.mxu0 0.0
        %1318 = vmatpush.msra.mxu0 0.0
        %1319 = vmatpush.msra.mxu0 0.0
        %1320 = vmatpush.msra.mxu0 %v1304
        %1321 = vmatpush.msra.mxu0 %v1293
        %1322 = vmatmul.f32.gmra.mxu0 %v1301
        %v1323 = vpop.f32.mrf.mxu0
        %v1324 = vadd.f32 %v1297, %v1323
        %1325 = vdwg.mxu0
        %v1326 = vxor.u32 %v1324, 2147483648
        %v1327 = vmul.f32 %v1326, 1.442695
        %v1328 = vpow.pop %v1327
        %v1329 = vadd.f32 %v1328, 1.0
        %v1330 = vrcp.pop %v1329
        %v1331 = vmul.f32 %v1329, %v1330
        %v1332 = vsub.f32 1.0, %v1331
        %v1333 = vmul.f32 %v1330, %v1332
        %v1334 = vadd.f32 %v1330, %v1333
        %vm1335 = vweird.f32 %v1329
        %vm1336 = vweird.f32 %v1330
        %vm1337 = vmor %vm1335, %vm1336
        %v1338 = vsel %vm1337, %v1330, %v1334
        %v1339 = vand.u32 2147483647, %v1329
        %vm1340 = vcmp.eq.f32.partialorder %v1339, 8.507059e+37
        %v1341 = vand.u32 %v1329, 2147483648
        %v1342 = vor.u32 1.1754944e-38, %v1341
        %v1343 = vsel %vm1340, %v1342, %v1338
        %v1344 = vmul.f32 1.0, %v1343
        %v1345 = vld [vmem:[%s7] sm:$0xff]
        %v1346 = vld [vmem:[%s7 + $0x8] sm:$0x3]
        %v1347 = vld [vmem:[%s8] sm:$0x1]
        %v1349 = vperm.slane %v1347, 0
        %v1352 = vsel %vm1299, %v1344, 0
        %v1355 = vsel %vm1225, %v1346, 0
        %1357 = vmatpush.msra.mxu0 0.0
        %1358 = vmatpush.msra.mxu0 0.0
        %1359 = vmatpush.msra.mxu0 0.0
        %1360 = vmatpush.msra.mxu0 0.0
        %1361 = vmatpush.msra.mxu0 0.0
        %1362 = vmatpush.msra.mxu0 0.0
        %1363 = vmatpush.msra.mxu0 0.0
        %1364 = vmatpush.msra.mxu0 0.0
        %1365 = vmatpush.msra.mxu0 0.0
        %1366 = vmatpush.msra.mxu0 0.0
        %1367 = vmatpush.msra.mxu0 0.0
        %1368 = vmatpush.msra.mxu0 0.0
        %1369 = vmatpush.msra.mxu0 0.0
        %1370 = vmatpush.msra.mxu0 0.0
        %1371 = vmatpush.msra.mxu0 %v1355
        %1372 = vmatpush.msra.mxu0 %v1345
        %1373 = vmatmul.f32.gmra.mxu0 %v1352
        %v1374 = vpop.f32.mrf.mxu0
        %v1375 = vadd.f32 %v1349, %v1374
        %1376 = vdwg.mxu0
        %1377 = vmax.xlane.f32.xlu0 %v1375
        %v1378 = vpop.xlane.xlu0 %1377
        %v1379 = vsub.f32 %v1375, %v1378
        %v1380 = vmul.f32 %v1379, 1.442695
        %v1381 = vpow.pop %v1380
        %1382 = vadd.xlane.f32.xlu0 %v1381
        %v1383 = vpop.xlane.xlu0 %1382
        %v1384 = vrcp.pop %v1383
        %v1385 = vmul.f32 %v1383, %v1384
        %v1386 = vsub.f32 1.0, %v1385
        %v1387 = vmul.f32 %v1384, %v1386
        %v1388 = vadd.f32 %v1384, %v1387
        %vm1389 = vweird.f32 %v1383
        %vm1390 = vweird.f32 %v1384
        %vm1391 = vmor %vm1389, %vm1390
        %v1392 = vsel %vm1391, %v1384, %v1388
        %v1393 = vand.u32 2147483647, %v1383
        %vm1394 = vcmp.eq.f32.partialorder %v1393, 8.507059e+37
        %v1395 = vand.u32 %v1383, 2147483648
        %v1396 = vor.u32 1.1754944e-38, %v1395
        %v1397 = vsel %vm1394, %v1396, %v1392
        %v1398 = vmul.f32 %v1381, %v1397
        %1399 = vst [vmem:[%s353] sm:$0xff] %v1398
        %s1400 = sand.u32 %s228, 1
        %s1401 = scalar_lea.sflag [#allocation4], %s1400
        %s1402 = sand.u32 %s228, 1
        %s1403 = smul.addr %s1402, 8
        %s1404 = scalar_lea.vmem [#allocation5], %s1403
        // Predicated region
        $region61: #{tpu_custom_call.1} parent=55 // pred_check
          %p1405 = pneg %p238
        $region62: #{tpu_custom_call.1} parent=55 // pred_check_branch
          %1407 = sbr.rel (%p1405) target = $region64
        $region63: #{tpu_custom_call.1} parent=55 // pred_region
          %1409 = vsyncadd %s1401, 0
          %s1410 = smul.addr %s26, 8
          %s1411 = scalar_lea.hbm %s9, %s1410
          %s1413 = sshll.u32 %s1404, 4
          %s1414 = int_to_ptr.vmem [resolvable:$true] %s1413
          %s1415 = sshll.u32 %s1411, 4
          %s1416 = int_to_ptr.hbm [resolvable:$true] %s1415
          %1418 = dma.vmem_to_hbm [thread:$0]  %s1414, 128, %s1416, %s1401
        $region64: #{tpu_custom_call.1} parent=55 // pred_fallthru
          _
      $region56: #{tpu_custom_call.1} parent=5 // pred_fallthru
        _
      %p1419 = scmp.le.s32.totalorder 2, %s21
      // Predicated region
      $region65: #{tpu_custom_call.1} parent=5 // pred_check
        %p1420 = pneg %p1419
      $region66: #{tpu_custom_call.1} parent=5 // pred_check_branch
        %1422 = sbr.rel (%p1420) target = $region68
      $region67: #{tpu_custom_call.1} parent=5 // pred_region
        %s1423 = ssub.s32 %s21, 2
        // Predicated region
        $region69: #{tpu_custom_call.1} parent=67 // pred_check
          %p1424 = pneg %p244
        $region70: #{tpu_custom_call.1} parent=67 // pred_check_branch
          %1426 = sbr.rel (%p1424) target = $region72
        $region71: #{tpu_custom_call.1} parent=67 // pred_region
          %s1427 = sand.u32 %s229, 1
          %s1428 = scalar_lea.sflag [#allocation4], %s1427
          %s1429 = sand.u32 %s229, 1
          %s1430 = smul.addr %s1429, 8
          %s1431 = scalar_lea.vmem [#allocation5], %s1430
          %1433 = dma.done %s1428, 128
        $region72: #{tpu_custom_call.1} parent=67 // pred_fallthru
          _
      $region68: #{tpu_custom_call.1} parent=5 // pred_fallthru
        _
    $region6: #{tpu_custom_call.1} parent=1 // loop_footer
      %s25 = sadd.s32 1, %s21
    $region7: #{tpu_custom_call.1} parent=1 // loop_footer_branch
      %20 = sbr.rel target = $region3
    $region8: #{tpu_custom_call.1} parent=1 // loop_exit
      _
    %1434 = vsyncpa [#allocation3], 1
    %s1435 = scalar_lea.sflag [#allocation3], 1
    %1436 = vsyncpa %s1435, 1
    %1437 = vsyncpa [#allocation4], 1
    %s1438 = scalar_lea.sflag [#allocation4], 1
    %1439 = vsyncpa %s1438, 1

</llo_original>
